<compile_context>
chip_gen: v7x
topology: tpu7x:2x2x1
jax: 0.10.0
libtpu: 0.0.40
codegen_flags: <defaults>
</compile_context>

<pallas_src>
import jax
import jax.numpy as jnp
from jax.experimental import pallas as pl
from jax.experimental.pallas import tpu as pltpu

BN_EPS = 1e-5


def _full_spec(shape):
    # whole-array block, single grid point
    return pl.BlockSpec(shape, lambda *_: (0,) * len(shape))


# ---------------------------------------------------------------------------
# Fused kernel: all GIN conv layers + JK('cat') + mean pool + MLP head + log_softmax
# ---------------------------------------------------------------------------
def make_gin_jk_kernel(num_layers, hidden):
    def kernel(*refs):
        a_ref, x_ref, pool_ref, invc_ref, eps_ref = refs[:5]
        idx = 5
        layer_refs = []
        for _ in range(num_layers):
            layer_refs.append(refs[idx:idx + 6])
            idx += 6
        wl1_ref, bl1_ref, wl2_ref, bl2_ref = refs[idx:idx + 4]
        out_ref = refs[idx + 4]

        a = a_ref[...]               # (N, N) bf16 adjacency, loaded once, reused each layer
        pool = pool_ref[...]         # (B, N) bf16 one-hot (sum pooling)
        inv_counts = invc_ref[...]   # (B, 1) f32, 1 / nodes-per-graph
        h = x_ref[...]               # (N, F) f32 node features
        h_bf16 = h.astype(jnp.bfloat16)

        num_graphs = pool.shape[0]
        # accumulator for lin1(cat(pooled layers)): sum over layers of small matmuls
        hh = jnp.zeros((num_graphs, hidden), jnp.float32)

        for l in range(num_layers):
            w1_ref, b1_ref, w2_ref, b2_ref, sc_ref, sh_ref = layer_refs[l]
            eps = eps_ref[l]         # scalar read from SMEM

            # GIN aggregation: (1 + eps) * x_i + sum_{j in N(i)} x_j
            agg = jnp.dot(a, h_bf16, preferred_element_type=jnp.float32)
            z = agg + (1.0 + eps) * h

            # MLP: Linear -> ReLU -> Linear -> ReLU (f32 elementwise, bf16 matmuls)
            t = jnp.dot(z.astype(jnp.bfloat16), w1_ref[...],
                        preferred_element_type=jnp.float32) + b1_ref[...]
            t = jnp.maximum(t, 0.0)
            t = jnp.dot(t.astype(jnp.bfloat16), w2_ref[...],
                        preferred_element_type=jnp.float32) + b2_ref[...]
            t = jnp.maximum(t, 0.0)

            # BatchNorm1d (eval mode) folded to precomputed scale/shift
            h = t * sc_ref[...] + sh_ref[...]
            h_bf16 = h.astype(jnp.bfloat16)

            # global_mean_pool of this layer's node features (B << N: pool first)
            pooled = jnp.dot(pool, h_bf16,
                             preferred_element_type=jnp.float32) * inv_counts

            # JK 'cat' + lin1 fused: cat(xs) @ WL1 == sum_l xs_l @ WL1[l*H:(l+1)*H]
            hh = hh + jnp.dot(pooled.astype(jnp.bfloat16),
                              wl1_ref[l * hidden:(l + 1) * hidden, :],
                              preferred_element_type=jnp.float32)

        # Head: relu(lin1) -> dropout(identity in eval) -> lin2 -> log_softmax
        hh = jnp.maximum(hh + bl1_ref[...], 0.0)
        # TODO(synk): F.dropout(p=0.5) is identity in eval mode; training RNG mask not applied.
        logits = jnp.dot(hh.astype(jnp.bfloat16), wl2_ref[...],
                         preferred_element_type=jnp.float32) + bl2_ref[...]
        m = jnp.max(logits, axis=-1, keepdims=True)
        lse = jnp.log(jnp.sum(jnp.exp(logits - m), axis=-1, keepdims=True)) + m
        out_ref[...] = logits - lse

    return kernel


# ---------------------------------------------------------------------------
# Glue: graph structure -> dense matrices, parameter init, full forward
# ---------------------------------------------------------------------------
def build_adjacency(edge_index, num_nodes):
    src, dst = edge_index[0], edge_index[1]
    a = jnp.zeros((num_nodes, num_nodes), jnp.float32)
    # message flows src -> dst, aggregation at dst is a sum
    return a.at[dst, src].add(1.0)


def build_pool(batch, num_graphs):
    onehot = jax.nn.one_hot(batch, num_graphs, dtype=jnp.float32).T  # [B, N]
    counts = jnp.maximum(onehot.sum(axis=1, keepdims=True), 1.0)     # [B, 1]
    return onehot.astype(jnp.bfloat16), (1.0 / counts).astype(jnp.float32)


def init_linear(key, fan_in, fan_out):
    kw, kb = jax.random.split(key)
    # weight stored as [in, out] so the kernel does x @ W (PyTorch does x @ W.T)
    w = jax.random.normal(kw, (fan_in, fan_out), jnp.float32) * 0.1
    b = jax.random.normal(kb, (1, fan_out), jnp.float32) * 0.01
    return w, b


def init_gin_layer(key, fan_in, hidden):
    k1, k2 = jax.random.split(key)
    w1, b1 = init_linear(k1, fan_in, hidden)
    w2, b2 = init_linear(k2, hidden, hidden)
    gamma = jnp.ones((1, hidden), jnp.float32)
    beta = jnp.zeros((1, hidden), jnp.float32)
    running_mean = jnp.zeros((1, hidden), jnp.float32)
    running_var = jnp.ones((1, hidden), jnp.float32)
    eps = jnp.zeros((1, 1), jnp.float32)   # GINConv(train_eps=True) initializes eps to 0
    return (eps, w1, b1, w2, b2, gamma, beta, running_mean, running_var)


def init_gin_jk_params(key, num_features, num_classes, num_layers, hidden):
    keys = jax.random.split(key, num_layers + 2)
    conv_params = [init_gin_layer(keys[0], num_features, hidden)]
    for i in range(num_layers - 1):
        conv_params.append(init_gin_layer(keys[1 + i], hidden, hidden))
    # JumpingKnowledge mode='cat' -> lin1 input is num_layers * hidden
    wl1, bl1 = init_linear(keys[num_layers], num_layers * hidden, hidden)
    wl2, bl2 = init_linear(keys[num_layers + 1], hidden, num_classes)
    return conv_params, (wl1, bl1, wl2, bl2)


def fold_bn(gamma, beta, mean, var):
    scale = gamma / jnp.sqrt(var + BN_EPS)
    shift = beta - mean * scale
    return scale, shift


def gin_with_jk_forward(x, edge_index, batch, num_graphs, conv_params, head_params):
    n = x.shape[0]
    num_layers = len(conv_params)
    hidden = conv_params[0][3].shape[1]         # w2 output dim
    wl1, bl1, wl2, bl2 = head_params
    num_classes = wl2.shape[1]

    a = build_adjacency(edge_index, n).astype(jnp.bfloat16)   # exact small ints in bf16
    pool_onehot, inv_counts = build_pool(batch, num_graphs)
    eps_all = jnp.concatenate(
        [p[0].reshape(-1) for p in conv_params]).astype(jnp.float32)  # (L,) scalars -> SMEM

    flat_inputs = [a, x.astype(jnp.float32), pool_onehot, inv_counts, eps_all]
    in_specs = [
        _full_spec(a.shape),
        _full_spec(x.shape),
        _full_spec(pool_onehot.shape),
        _full_spec(inv_counts.shape),
        pl.BlockSpec(memory_space=pltpu.MemorySpace.SMEM),   # per-layer eps scalars
    ]
    for (eps, w1, b1, w2, b2, gamma, beta, mean, var) in conv_params:
        scale, shift = fold_bn(gamma, beta, mean, var)       # BN folded outside the kernel
        layer_inputs = [
            w1.astype(jnp.bfloat16), b1.astype(jnp.float32),
            w2.astype(jnp.bfloat16), b2.astype(jnp.float32),
            scale.astype(jnp.float32), shift.astype(jnp.float32),
        ]
        flat_inputs += layer_inputs
        in_specs += [_full_spec(t.shape) for t in layer_inputs]

    head_inputs = [wl1.astype(jnp.bfloat16), bl1.astype(jnp.float32),
                   wl2.astype(jnp.bfloat16), bl2.astype(jnp.float32)]
    flat_inputs += head_inputs
    in_specs += [_full_spec(t.shape) for t in head_inputs]

    kernel = make_gin_jk_kernel(num_layers, hidden)
    return pl.pallas_call(
        kernel,
        out_shape=jax.ShapeDtypeStruct((num_graphs, num_classes), jnp.float32),
        grid=(1,),
        in_specs=in_specs,
        out_specs=_full_spec((num_graphs, num_classes)),
        compiler_params=pltpu.CompilerParams(
            dimension_semantics=("arbitrary",)),
    )(*flat_inputs)


# ---------------------------------------------------------------------------
# Pure-JAX reference (same bf16 cast points) for a correctness check
# ---------------------------------------------------------------------------
def gin_with_jk_reference(x, edge_index, batch, num_graphs, conv_params, head_params):
    n = x.shape[0]
    wl1, bl1, wl2, bl2 = head_params
    a = build_adjacency(edge_index, n).astype(jnp.bfloat16)
    pool_onehot, inv_counts = build_pool(batch, num_graphs)

    h = x.astype(jnp.float32)
    pooled_layers = []
    for (eps, w1, b1, w2, b2, gamma, beta, mean, var) in conv_params:
        scale, shift = fold_bn(gamma, beta, mean, var)
        agg = jnp.dot(a, h.astype(jnp.bfloat16), preferred_element_type=jnp.float32)
        z = agg + (1.0 + eps[0, 0]) * h
        t = jnp.dot(z.astype(jnp.bfloat16), w1.astype(jnp.bfloat16),
                    preferred_element_type=jnp.float32) + b1
        t = jnp.maximum(t, 0.0)
        t = jnp.dot(t.astype(jnp.bfloat16), w2.astype(jnp.bfloat16),
                    preferred_element_type=jnp.float32) + b2
        t = jnp.maximum(t, 0.0)
        h = t * scale + shift
        pooled_layers.append(
            jnp.dot(pool_onehot, h.astype(jnp.bfloat16),
                    preferred_element_type=jnp.float32) * inv_counts)
    pooled = jnp.concatenate(pooled_layers, axis=-1)           # JK 'cat' of pooled features
    hh = jnp.dot(pooled.astype(jnp.bfloat16), wl1.astype(jnp.bfloat16),
                 preferred_element_type=jnp.float32) + bl1
    hh = jnp.maximum(hh, 0.0)
    logits = jnp.dot(hh.astype(jnp.bfloat16), wl2.astype(jnp.bfloat16),
                     preferred_element_type=jnp.float32) + bl2
    return jax.nn.log_softmax(logits, axis=-1)


if __name__ == "__main__":
    # small synthetic problem: 4 graphs x 32 nodes, 16 input features,
    # hidden 128 (lane-dense), 3 GIN layers (JK cat width = 384), 8 classes
    NUM_FEATURES = 16
    NUM_CLASSES = 8
    NUM_LAYERS = 3
    HIDDEN = 128
    NUM_GRAPHS = 4
    NODES_PER_GRAPH = 32
    EDGES_PER_GRAPH = 64
    N = NUM_GRAPHS * NODES_PER_GRAPH

    key = jax.random.PRNGKey(0)
    k_x, k_src, k_dst, k_params = jax.random.split(key, 4)

    x = jax.random.normal(k_x, (N, NUM_FEATURES), jnp.float32)

    # random intra-graph edges (src -> dst)
    offs = (jnp.arange(NUM_GRAPHS) * NODES_PER_GRAPH)[:, None]
    src = jax.random.randint(k_src, (NUM_GRAPHS, EDGES_PER_GRAPH), 0, NODES_PER_GRAPH) + offs
    dst = jax.random.randint(k_dst, (NUM_GRAPHS, EDGES_PER_GRAPH), 0, NODES_PER_GRAPH) + offs
    edge_index = jnp.stack([src.reshape(-1), dst.reshape(-1)], axis=0)  # [2, E]

    batch = jnp.repeat(jnp.arange(NUM_GRAPHS, dtype=jnp.int32), NODES_PER_GRAPH)

    conv_params, head_params = init_gin_jk_params(
        k_params, NUM_FEATURES, NUM_CLASSES, NUM_LAYERS, HIDDEN)

    out = gin_with_jk_forward(x, edge_index, batch, NUM_GRAPHS, conv_params, head_params)
    out = jax.block_until_ready(out)
    assert out.shape == (NUM_GRAPHS, NUM_CLASSES)
    # log_softmax rows should exponentiate-and-sum to ~1
    assert jnp.allclose(jnp.sum(jnp.exp(out), axis=-1), 1.0, atol=1e-4)
    # match pure-JAX reference (same bf16 cast points -> tight agreement)
    ref = gin_with_jk_reference(x, edge_index, batch, NUM_GRAPHS, conv_params, head_params)
    assert jnp.max(jnp.abs(out - ref)) < 2e-2, float(jnp.max(jnp.abs(out - ref)))
    print("KERNEL_OK")
</pallas_src>

<mosaic_0001>
module attributes {stable_mosaic.version = 11 : i64} {
  func.func @kernel(%arg0: i32, %arg1: memref<128x128xbf16, #tpu.memory_space<vmem>>, %arg2: memref<128x16xf32, #tpu.memory_space<vmem>>, %arg3: memref<4x128xbf16, #tpu.memory_space<vmem>>, %arg4: memref<4x1xf32, #tpu.memory_space<vmem>>, %arg5: memref<3xf32, #tpu.memory_space<smem>>, %arg6: memref<16x128xbf16, #tpu.memory_space<vmem>>, %arg7: memref<1x128xf32, #tpu.memory_space<vmem>>, %arg8: memref<128x128xbf16, #tpu.memory_space<vmem>>, %arg9: memref<1x128xf32, #tpu.memory_space<vmem>>, %arg10: memref<1x128xf32, #tpu.memory_space<vmem>>, %arg11: memref<1x128xf32, #tpu.memory_space<vmem>>, %arg12: memref<128x128xbf16, #tpu.memory_space<vmem>>, %arg13: memref<1x128xf32, #tpu.memory_space<vmem>>, %arg14: memref<128x128xbf16, #tpu.memory_space<vmem>>, %arg15: memref<1x128xf32, #tpu.memory_space<vmem>>, %arg16: memref<1x128xf32, #tpu.memory_space<vmem>>, %arg17: memref<1x128xf32, #tpu.memory_space<vmem>>, %arg18: memref<128x128xbf16, #tpu.memory_space<vmem>>, %arg19: memref<1x128xf32, #tpu.memory_space<vmem>>, %arg20: memref<128x128xbf16, #tpu.memory_space<vmem>>, %arg21: memref<1x128xf32, #tpu.memory_space<vmem>>, %arg22: memref<1x128xf32, #tpu.memory_space<vmem>>, %arg23: memref<1x128xf32, #tpu.memory_space<vmem>>, %arg24: memref<384x128xbf16, #tpu.memory_space<vmem>>, %arg25: memref<1x128xf32, #tpu.memory_space<vmem>>, %arg26: memref<128x8xbf16, #tpu.memory_space<vmem>>, %arg27: memref<1x8xf32, #tpu.memory_space<vmem>>, %arg28: memref<4x8xf32, #tpu.memory_space<vmem>>) attributes {dimension_semantics = [#tpu.dimension_semantics<arbitrary>], iteration_bounds = array<i64: 1>, scalar_prefetch = 0 : i64, scratch_operands = 0 : i64, tpu.core_type = #tpu.core_type<tc>, window_params = [{pipeline_mode = #tpu.pipeline_mode<synchronous>, transform_indices = @transform_0, window_bounds = array<i64: 128, 128>}, {pipeline_mode = #tpu.pipeline_mode<synchronous>, transform_indices = @transform_1, window_bounds = array<i64: 128, 16>}, {pipeline_mode = #tpu.pipeline_mode<synchronous>, transform_indices = @transform_2, window_bounds = array<i64: 4, 128>}, {pipeline_mode = #tpu.pipeline_mode<synchronous>, transform_indices = @transform_3, window_bounds = array<i64: 4, 1>}, {transform_indices = @transform_4, window_bounds = array<i64: 3>}, {pipeline_mode = #tpu.pipeline_mode<synchronous>, transform_indices = @transform_5, window_bounds = array<i64: 16, 128>}, {pipeline_mode = #tpu.pipeline_mode<synchronous>, transform_indices = @transform_6, window_bounds = array<i64: 1, 128>}, {pipeline_mode = #tpu.pipeline_mode<synchronous>, transform_indices = @transform_7, window_bounds = array<i64: 128, 128>}, {pipeline_mode = #tpu.pipeline_mode<synchronous>, transform_indices = @transform_8, window_bounds = array<i64: 1, 128>}, {pipeline_mode = #tpu.pipeline_mode<synchronous>, transform_indices = @transform_9, window_bounds = array<i64: 1, 128>}, {pipeline_mode = #tpu.pipeline_mode<synchronous>, transform_indices = @transform_10, window_bounds = array<i64: 1, 128>}, {pipeline_mode = #tpu.pipeline_mode<synchronous>, transform_indices = @transform_11, window_bounds = array<i64: 128, 128>}, {pipeline_mode = #tpu.pipeline_mode<synchronous>, transform_indices = @transform_12, window_bounds = array<i64: 1, 128>}, {pipeline_mode = #tpu.pipeline_mode<synchronous>, transform_indices = @transform_13, window_bounds = array<i64: 128, 128>}, {pipeline_mode = #tpu.pipeline_mode<synchronous>, transform_indices = @transform_14, window_bounds = array<i64: 1, 128>}, {pipeline_mode = #tpu.pipeline_mode<synchronous>, transform_indices = @transform_15, window_bounds = array<i64: 1, 128>}, {pipeline_mode = #tpu.pipeline_mode<synchronous>, transform_indices = @transform_16, window_bounds = array<i64: 1, 128>}, {pipeline_mode = #tpu.pipeline_mode<synchronous>, transform_indices = @transform_17, window_bounds = array<i64: 128, 128>}, {pipeline_mode = #tpu.pipeline_mode<synchronous>, transform_indices = @transform_18, window_bounds = array<i64: 1, 128>}, {pipeline_mode = #tpu.pipeline_mode<synchronous>, transform_indices = @transform_19, window_bounds = array<i64: 128, 128>}, {pipeline_mode = #tpu.pipeline_mode<synchronous>, transform_indices = @transform_20, window_bounds = array<i64: 1, 128>}, {pipeline_mode = #tpu.pipeline_mode<synchronous>, transform_indices = @transform_21, window_bounds = array<i64: 1, 128>}, {pipeline_mode = #tpu.pipeline_mode<synchronous>, transform_indices = @transform_22, window_bounds = array<i64: 1, 128>}, {pipeline_mode = #tpu.pipeline_mode<synchronous>, transform_indices = @transform_23, window_bounds = array<i64: 384, 128>}, {pipeline_mode = #tpu.pipeline_mode<synchronous>, transform_indices = @transform_24, window_bounds = array<i64: 1, 128>}, {pipeline_mode = #tpu.pipeline_mode<synchronous>, transform_indices = @transform_25, window_bounds = array<i64: 128, 8>}, {pipeline_mode = #tpu.pipeline_mode<synchronous>, transform_indices = @transform_26, window_bounds = array<i64: 1, 8>}, {pipeline_mode = #tpu.pipeline_mode<synchronous>, transform_indices = @transform_27, window_bounds = array<i64: 4, 8>}]} {
    %c0 = arith.constant 0 : index
    %c0_0 = arith.constant 0 : index
    %0 = vector.load %arg1[%c0, %c0_0] : memref<128x128xbf16, #tpu.memory_space<vmem>>, vector<128x128xbf16>
    %c0_1 = arith.constant 0 : index
    %c0_2 = arith.constant 0 : index
    %1 = vector.load %arg3[%c0_1, %c0_2] : memref<4x128xbf16, #tpu.memory_space<vmem>>, vector<4x128xbf16>
    %c0_3 = arith.constant 0 : index
    %c0_4 = arith.constant 0 : index
    %2 = vector.load %arg4[%c0_3, %c0_4] : memref<4x1xf32, #tpu.memory_space<vmem>>, vector<4x1xf32>
    %c0_5 = arith.constant 0 : index
    %c0_6 = arith.constant 0 : index
    %3 = vector.load %arg2[%c0_5, %c0_6] : memref<128x16xf32, #tpu.memory_space<vmem>>, vector<128x16xf32>
    %4 = arith.truncf %3 : vector<128x16xf32> to vector<128x16xbf16>
    %cst = arith.constant 0.000000e+00 : f32
    %5 = vector.broadcast %cst : f32 to vector<4x128xf32>
    %c0_7 = arith.constant 0 : index
    %6 = memref.load %arg5[%c0_7] : memref<3xf32, #tpu.memory_space<smem>>
    %cst_8 = arith.constant dense<0.000000e+00> : vector<128x16xf32>
    %7 = tpu.matmul %0, %4, %cst_8 {dimension_numbers = #tpu.dot_dimension_numbers<[1], [0], [0], [1], [0, 0, 1, 1], [], []>} : vector<128x128xbf16>, vector<128x16xbf16>, vector<128x16xf32> -> vector<128x16xf32>
    %cst_9 = arith.constant 1.000000e+00 : f32
    %8 = arith.addf %cst_9, %6 : f32
    %9 = vector.broadcast %8 : f32 to vector<128x16xf32>
    %10 = arith.mulf %9, %3 : vector<128x16xf32>
    %11 = arith.addf %7, %10 : vector<128x16xf32>
    %12 = arith.truncf %11 : vector<128x16xf32> to vector<128x16xbf16>
    %c0_10 = arith.constant 0 : index
    %c0_11 = arith.constant 0 : index
    %13 = vector.load %arg6[%c0_10, %c0_11] : memref<16x128xbf16, #tpu.memory_space<vmem>>, vector<16x128xbf16>
    %cst_12 = arith.constant dense<0.000000e+00> : vector<128x128xf32>
    %14 = tpu.matmul %12, %13, %cst_12 {dimension_numbers = #tpu.dot_dimension_numbers<[1], [0], [0], [1], [0, 0, 1, 1], [], []>} : vector<128x16xbf16>, vector<16x128xbf16>, vector<128x128xf32> -> vector<128x128xf32>
    %c0_13 = arith.constant 0 : index
    %c0_14 = arith.constant 0 : index
    %15 = vector.load %arg7[%c0_13, %c0_14] : memref<1x128xf32, #tpu.memory_space<vmem>>, vector<1x128xf32>
    %16 = vector.broadcast %15 : vector<1x128xf32> to vector<128x128xf32>
    %17 = arith.addf %14, %16 : vector<128x128xf32>
    %cst_15 = arith.constant 0.000000e+00 : f32
    %18 = vector.broadcast %cst_15 : f32 to vector<128x128xf32>
    %19 = arith.maximumf %17, %18 : vector<128x128xf32>
    %20 = arith.truncf %19 : vector<128x128xf32> to vector<128x128xbf16>
    %c0_16 = arith.constant 0 : index
    %c0_17 = arith.constant 0 : index
    %21 = vector.load %arg8[%c0_16, %c0_17] : memref<128x128xbf16, #tpu.memory_space<vmem>>, vector<128x128xbf16>
    %cst_18 = arith.constant dense<0.000000e+00> : vector<128x128xf32>
    %22 = tpu.matmul %20, %21, %cst_18 {dimension_numbers = #tpu.dot_dimension_numbers<[1], [0], [0], [1], [0, 0, 1, 1], [], []>} : vector<128x128xbf16>, vector<128x128xbf16>, vector<128x128xf32> -> vector<128x128xf32>
    %c0_19 = arith.constant 0 : index
    %c0_20 = arith.constant 0 : index
    %23 = vector.load %arg9[%c0_19, %c0_20] : memref<1x128xf32, #tpu.memory_space<vmem>>, vector<1x128xf32>
    %24 = vector.broadcast %23 : vector<1x128xf32> to vector<128x128xf32>
    %25 = arith.addf %22, %24 : vector<128x128xf32>
    %cst_21 = arith.constant 0.000000e+00 : f32
    %26 = vector.broadcast %cst_21 : f32 to vector<128x128xf32>
    %27 = arith.maximumf %25, %26 : vector<128x128xf32>
    %c0_22 = arith.constant 0 : index
    %c0_23 = arith.constant 0 : index
    %28 = vector.load %arg10[%c0_22, %c0_23] : memref<1x128xf32, #tpu.memory_space<vmem>>, vector<1x128xf32>
    %29 = vector.broadcast %28 : vector<1x128xf32> to vector<128x128xf32>
    %30 = arith.mulf %27, %29 : vector<128x128xf32>
    %c0_24 = arith.constant 0 : index
    %c0_25 = arith.constant 0 : index
    %31 = vector.load %arg11[%c0_24, %c0_25] : memref<1x128xf32, #tpu.memory_space<vmem>>, vector<1x128xf32>
    %32 = vector.broadcast %31 : vector<1x128xf32> to vector<128x128xf32>
    %33 = arith.addf %30, %32 : vector<128x128xf32>
    %34 = arith.truncf %33 : vector<128x128xf32> to vector<128x128xbf16>
    %cst_26 = arith.constant dense<0.000000e+00> : vector<4x128xf32>
    %35 = tpu.matmul %1, %34, %cst_26 {dimension_numbers = #tpu.dot_dimension_numbers<[1], [0], [0], [1], [0, 0, 1, 1], [], []>} : vector<4x128xbf16>, vector<128x128xbf16>, vector<4x128xf32> -> vector<4x128xf32>
    %36 = vector.broadcast %2 : vector<4x1xf32> to vector<4x128xf32>
    %37 = arith.mulf %35, %36 : vector<4x128xf32>
    %38 = arith.truncf %37 : vector<4x128xf32> to vector<4x128xbf16>
    %c0_27 = arith.constant 0 : index
    %c0_28 = arith.constant 0 : index
    %39 = vector.load %arg24[%c0_27, %c0_28] : memref<384x128xbf16, #tpu.memory_space<vmem>>, vector<128x128xbf16>
    %cst_29 = arith.constant dense<0.000000e+00> : vector<4x128xf32>
    %40 = tpu.matmul %38, %39, %cst_29 {dimension_numbers = #tpu.dot_dimension_numbers<[1], [0], [0], [1], [0, 0, 1, 1], [], []>} : vector<4x128xbf16>, vector<128x128xbf16>, vector<4x128xf32> -> vector<4x128xf32>
    %41 = arith.addf %5, %40 : vector<4x128xf32>
    %c1 = arith.constant 1 : index
    %42 = memref.load %arg5[%c1] : memref<3xf32, #tpu.memory_space<smem>>
    %cst_30 = arith.constant dense<0.000000e+00> : vector<128x128xf32>
    %43 = tpu.matmul %0, %34, %cst_30 {dimension_numbers = #tpu.dot_dimension_numbers<[1], [0], [0], [1], [0, 0, 1, 1], [], []>} : vector<128x128xbf16>, vector<128x128xbf16>, vector<128x128xf32> -> vector<128x128xf32>
    %cst_31 = arith.constant 1.000000e+00 : f32
    %44 = arith.addf %cst_31, %42 : f32
    %45 = vector.broadcast %44 : f32 to vector<128x128xf32>
    %46 = arith.mulf %45, %33 : vector<128x128xf32>
    %47 = arith.addf %43, %46 : vector<128x128xf32>
    %48 = arith.truncf %47 : vector<128x128xf32> to vector<128x128xbf16>
    %c0_32 = arith.constant 0 : index
    %c0_33 = arith.constant 0 : index
    %49 = vector.load %arg12[%c0_32, %c0_33] : memref<128x128xbf16, #tpu.memory_space<vmem>>, vector<128x128xbf16>
    %cst_34 = arith.constant dense<0.000000e+00> : vector<128x128xf32>
    %50 = tpu.matmul %48, %49, %cst_34 {dimension_numbers = #tpu.dot_dimension_numbers<[1], [0], [0], [1], [0, 0, 1, 1], [], []>} : vector<128x128xbf16>, vector<128x128xbf16>, vector<128x128xf32> -> vector<128x128xf32>
    %c0_35 = arith.constant 0 : index
    %c0_36 = arith.constant 0 : index
    %51 = vector.load %arg13[%c0_35, %c0_36] : memref<1x128xf32, #tpu.memory_space<vmem>>, vector<1x128xf32>
    %52 = vector.broadcast %51 : vector<1x128xf32> to vector<128x128xf32>
    %53 = arith.addf %50, %52 : vector<128x128xf32>
    %cst_37 = arith.constant 0.000000e+00 : f32
    %54 = vector.broadcast %cst_37 : f32 to vector<128x128xf32>
    %55 = arith.maximumf %53, %54 : vector<128x128xf32>
    %56 = arith.truncf %55 : vector<128x128xf32> to vector<128x128xbf16>
    %c0_38 = arith.constant 0 : index
    %c0_39 = arith.constant 0 : index
    %57 = vector.load %arg14[%c0_38, %c0_39] : memref<128x128xbf16, #tpu.memory_space<vmem>>, vector<128x128xbf16>
    %cst_40 = arith.constant dense<0.000000e+00> : vector<128x128xf32>
    %58 = tpu.matmul %56, %57, %cst_40 {dimension_numbers = #tpu.dot_dimension_numbers<[1], [0], [0], [1], [0, 0, 1, 1], [], []>} : vector<128x128xbf16>, vector<128x128xbf16>, vector<128x128xf32> -> vector<128x128xf32>
    %c0_41 = arith.constant 0 : index
    %c0_42 = arith.constant 0 : index
    %59 = vector.load %arg15[%c0_41, %c0_42] : memref<1x128xf32, #tpu.memory_space<vmem>>, vector<1x128xf32>
    %60 = vector.broadcast %59 : vector<1x128xf32> to vector<128x128xf32>
    %61 = arith.addf %58, %60 : vector<128x128xf32>
    %cst_43 = arith.constant 0.000000e+00 : f32
    %62 = vector.broadcast %cst_43 : f32 to vector<128x128xf32>
    %63 = arith.maximumf %61, %62 : vector<128x128xf32>
    %c0_44 = arith.constant 0 : index
    %c0_45 = arith.constant 0 : index
    %64 = vector.load %arg16[%c0_44, %c0_45] : memref<1x128xf32, #tpu.memory_space<vmem>>, vector<1x128xf32>
    %65 = vector.broadcast %64 : vector<1x128xf32> to vector<128x128xf32>
    %66 = arith.mulf %63, %65 : vector<128x128xf32>
    %c0_46 = arith.constant 0 : index
    %c0_47 = arith.constant 0 : index
    %67 = vector.load %arg17[%c0_46, %c0_47] : memref<1x128xf32, #tpu.memory_space<vmem>>, vector<1x128xf32>
    %68 = vector.broadcast %67 : vector<1x128xf32> to vector<128x128xf32>
    %69 = arith.addf %66, %68 : vector<128x128xf32>
    %70 = arith.truncf %69 : vector<128x128xf32> to vector<128x128xbf16>
    %cst_48 = arith.constant dense<0.000000e+00> : vector<4x128xf32>
    %71 = tpu.matmul %1, %70, %cst_48 {dimension_numbers = #tpu.dot_dimension_numbers<[1], [0], [0], [1], [0, 0, 1, 1], [], []>} : vector<4x128xbf16>, vector<128x128xbf16>, vector<4x128xf32> -> vector<4x128xf32>
    %72 = vector.broadcast %2 : vector<4x1xf32> to vector<4x128xf32>
    %73 = arith.mulf %71, %72 : vector<4x128xf32>
    %74 = arith.truncf %73 : vector<4x128xf32> to vector<4x128xbf16>
    %c128 = arith.constant 128 : index
    %c0_49 = arith.constant 0 : index
    %75 = vector.load %arg24[%c128, %c0_49] : memref<384x128xbf16, #tpu.memory_space<vmem>>, vector<128x128xbf16>
    %cst_50 = arith.constant dense<0.000000e+00> : vector<4x128xf32>
    %76 = tpu.matmul %74, %75, %cst_50 {dimension_numbers = #tpu.dot_dimension_numbers<[1], [0], [0], [1], [0, 0, 1, 1], [], []>} : vector<4x128xbf16>, vector<128x128xbf16>, vector<4x128xf32> -> vector<4x128xf32>
    %77 = arith.addf %41, %76 : vector<4x128xf32>
    %c2 = arith.constant 2 : index
    %78 = memref.load %arg5[%c2] : memref<3xf32, #tpu.memory_space<smem>>
    %cst_51 = arith.constant dense<0.000000e+00> : vector<128x128xf32>
    %79 = tpu.matmul %0, %70, %cst_51 {dimension_numbers = #tpu.dot_dimension_numbers<[1], [0], [0], [1], [0, 0, 1, 1], [], []>} : vector<128x128xbf16>, vector<128x128xbf16>, vector<128x128xf32> -> vector<128x128xf32>
    %cst_52 = arith.constant 1.000000e+00 : f32
    %80 = arith.addf %cst_52, %78 : f32
    %81 = vector.broadcast %80 : f32 to vector<128x128xf32>
    %82 = arith.mulf %81, %69 : vector<128x128xf32>
    %83 = arith.addf %79, %82 : vector<128x128xf32>
    %84 = arith.truncf %83 : vector<128x128xf32> to vector<128x128xbf16>
    %c0_53 = arith.constant 0 : index
    %c0_54 = arith.constant 0 : index
    %85 = vector.load %arg18[%c0_53, %c0_54] : memref<128x128xbf16, #tpu.memory_space<vmem>>, vector<128x128xbf16>
    %cst_55 = arith.constant dense<0.000000e+00> : vector<128x128xf32>
    %86 = tpu.matmul %84, %85, %cst_55 {dimension_numbers = #tpu.dot_dimension_numbers<[1], [0], [0], [1], [0, 0, 1, 1], [], []>} : vector<128x128xbf16>, vector<128x128xbf16>, vector<128x128xf32> -> vector<128x128xf32>
    %c0_56 = arith.constant 0 : index
    %c0_57 = arith.constant 0 : index
    %87 = vector.load %arg19[%c0_56, %c0_57] : memref<1x128xf32, #tpu.memory_space<vmem>>, vector<1x128xf32>
    %88 = vector.broadcast %87 : vector<1x128xf32> to vector<128x128xf32>
    %89 = arith.addf %86, %88 : vector<128x128xf32>
    %cst_58 = arith.constant 0.000000e+00 : f32
    %90 = vector.broadcast %cst_58 : f32 to vector<128x128xf32>
    %91 = arith.maximumf %89, %90 : vector<128x128xf32>
    %92 = arith.truncf %91 : vector<128x128xf32> to vector<128x128xbf16>
    %c0_59 = arith.constant 0 : index
    %c0_60 = arith.constant 0 : index
    %93 = vector.load %arg20[%c0_59, %c0_60] : memref<128x128xbf16, #tpu.memory_space<vmem>>, vector<128x128xbf16>
    %cst_61 = arith.constant dense<0.000000e+00> : vector<128x128xf32>
    %94 = tpu.matmul %92, %93, %cst_61 {dimension_numbers = #tpu.dot_dimension_numbers<[1], [0], [0], [1], [0, 0, 1, 1], [], []>} : vector<128x128xbf16>, vector<128x128xbf16>, vector<128x128xf32> -> vector<128x128xf32>
    %c0_62 = arith.constant 0 : index
    %c0_63 = arith.constant 0 : index
    %95 = vector.load %arg21[%c0_62, %c0_63] : memref<1x128xf32, #tpu.memory_space<vmem>>, vector<1x128xf32>
    %96 = vector.broadcast %95 : vector<1x128xf32> to vector<128x128xf32>
    %97 = arith.addf %94, %96 : vector<128x128xf32>
    %cst_64 = arith.constant 0.000000e+00 : f32
    %98 = vector.broadcast %cst_64 : f32 to vector<128x128xf32>
    %99 = arith.maximumf %97, %98 : vector<128x128xf32>
    %c0_65 = arith.constant 0 : index
    %c0_66 = arith.constant 0 : index
    %100 = vector.load %arg22[%c0_65, %c0_66] : memref<1x128xf32, #tpu.memory_space<vmem>>, vector<1x128xf32>
    %101 = vector.broadcast %100 : vector<1x128xf32> to vector<128x128xf32>
    %102 = arith.mulf %99, %101 : vector<128x128xf32>
    %c0_67 = arith.constant 0 : index
    %c0_68 = arith.constant 0 : index
    %103 = vector.load %arg23[%c0_67, %c0_68] : memref<1x128xf32, #tpu.memory_space<vmem>>, vector<1x128xf32>
    %104 = vector.broadcast %103 : vector<1x128xf32> to vector<128x128xf32>
    %105 = arith.addf %102, %104 : vector<128x128xf32>
    %106 = arith.truncf %105 : vector<128x128xf32> to vector<128x128xbf16>
    %cst_69 = arith.constant dense<0.000000e+00> : vector<4x128xf32>
    %107 = tpu.matmul %1, %106, %cst_69 {dimension_numbers = #tpu.dot_dimension_numbers<[1], [0], [0], [1], [0, 0, 1, 1], [], []>} : vector<4x128xbf16>, vector<128x128xbf16>, vector<4x128xf32> -> vector<4x128xf32>
    %108 = vector.broadcast %2 : vector<4x1xf32> to vector<4x128xf32>
    %109 = arith.mulf %107, %108 : vector<4x128xf32>
    %110 = arith.truncf %109 : vector<4x128xf32> to vector<4x128xbf16>
    %c256 = arith.constant 256 : index
    %c0_70 = arith.constant 0 : index
    %111 = vector.load %arg24[%c256, %c0_70] : memref<384x128xbf16, #tpu.memory_space<vmem>>, vector<128x128xbf16>
    %cst_71 = arith.constant dense<0.000000e+00> : vector<4x128xf32>
    %112 = tpu.matmul %110, %111, %cst_71 {dimension_numbers = #tpu.dot_dimension_numbers<[1], [0], [0], [1], [0, 0, 1, 1], [], []>} : vector<4x128xbf16>, vector<128x128xbf16>, vector<4x128xf32> -> vector<4x128xf32>
    %113 = arith.addf %77, %112 : vector<4x128xf32>
    %c0_72 = arith.constant 0 : index
    %c0_73 = arith.constant 0 : index
    %114 = vector.load %arg25[%c0_72, %c0_73] : memref<1x128xf32, #tpu.memory_space<vmem>>, vector<1x128xf32>
    %115 = vector.broadcast %114 : vector<1x128xf32> to vector<4x128xf32>
    %116 = arith.addf %113, %115 : vector<4x128xf32>
    %cst_74 = arith.constant 0.000000e+00 : f32
    %117 = vector.broadcast %cst_74 : f32 to vector<4x128xf32>
    %118 = arith.maximumf %116, %117 : vector<4x128xf32>
    %119 = arith.truncf %118 : vector<4x128xf32> to vector<4x128xbf16>
    %c0_75 = arith.constant 0 : index
    %c0_76 = arith.constant 0 : index
    %120 = vector.load %arg26[%c0_75, %c0_76] : memref<128x8xbf16, #tpu.memory_space<vmem>>, vector<128x8xbf16>
    %cst_77 = arith.constant dense<0.000000e+00> : vector<4x8xf32>
    %121 = tpu.matmul %119, %120, %cst_77 {dimension_numbers = #tpu.dot_dimension_numbers<[1], [0], [0], [1], [0, 0, 1, 1], [], []>} : vector<4x128xbf16>, vector<128x8xbf16>, vector<4x8xf32> -> vector<4x8xf32>
    %c0_78 = arith.constant 0 : index
    %c0_79 = arith.constant 0 : index
    %122 = vector.load %arg27[%c0_78, %c0_79] : memref<1x8xf32, #tpu.memory_space<vmem>>, vector<1x8xf32>
    %123 = vector.broadcast %122 : vector<1x8xf32> to vector<4x8xf32>
    %124 = arith.addf %121, %123 : vector<4x8xf32>
    %cst_80 = arith.constant dense<0xFF800000> : vector<4xf32>
    %125 = vector.multi_reduction <maximumf>, %124, %cst_80 [1] : vector<4x8xf32> to vector<4xf32>
    %126 = vector.shape_cast %125 : vector<4xf32> to vector<4x1xf32>
    %127 = vector.broadcast %126 : vector<4x1xf32> to vector<4x8xf32>
    %128 = arith.subf %124, %127 : vector<4x8xf32>
    %129 = math.exp %128 : vector<4x8xf32>
    %cst_81 = arith.constant dense<0.000000e+00> : vector<4xf32>
    %130 = vector.multi_reduction <add>, %129, %cst_81 [1] : vector<4x8xf32> to vector<4xf32>
    %131 = vector.shape_cast %130 : vector<4xf32> to vector<4x1xf32>
    %132 = math.log %131 : vector<4x1xf32>
    %133 = arith.addf %132, %126 : vector<4x1xf32>
    %134 = vector.broadcast %133 : vector<4x1xf32> to vector<4x8xf32>
    %135 = arith.subf %124, %134 : vector<4x8xf32>
    %c0_82 = arith.constant 0 : index
    %c0_83 = arith.constant 0 : index
    %136 = vector.load %arg28[%c0_82, %c0_83] : memref<4x8xf32, #tpu.memory_space<vmem>>, vector<4x8xf32>
    tpu.vector_store %arg28[%c0_82, %c0_83], %135 {strides = array<i32>} : memref<4x8xf32, #tpu.memory_space<vmem>>, vector<4x8xf32>,
    return
  }
  func.func @transform_0(%arg0: i32) -> (i32, i32) {
    %c0_i32 = arith.constant 0 : i32
    %c0_i32_0 = arith.constant 0 : i32
    %c0_i32_1 = arith.constant 0 : i32
    return %c0_i32, %c0_i32_0 : i32, i32
  }
  func.func @transform_1(%arg0: i32) -> (i32, i32) {
    %c0_i32 = arith.constant 0 : i32
    %c0_i32_0 = arith.constant 0 : i32
    %c0_i32_1 = arith.constant 0 : i32
    return %c0_i32, %c0_i32_0 : i32, i32
  }
  func.func @transform_2(%arg0: i32) -> (i32, i32) {
    %c0_i32 = arith.constant 0 : i32
    %c0_i32_0 = arith.constant 0 : i32
    %c0_i32_1 = arith.constant 0 : i32
    return %c0_i32, %c0_i32_0 : i32, i32
  }
  func.func @transform_3(%arg0: i32) -> (i32, i32) {
    %c0_i32 = arith.constant 0 : i32
    %c0_i32_0 = arith.constant 0 : i32
    %c0_i32_1 = arith.constant 0 : i32
    return %c0_i32, %c0_i32_0 : i32, i32
  }
  func.func @transform_4(%arg0: i32) -> i32 {
    %c0_i32 = arith.constant 0 : i32
    %c0_i32_0 = arith.constant 0 : i32
    return %c0_i32 : i32
  }
  func.func @transform_5(%arg0: i32) -> (i32, i32) {
    %c0_i32 = arith.constant 0 : i32
    %c0_i32_0 = arith.constant 0 : i32
    %c0_i32_1 = arith.constant 0 : i32
    return %c0_i32, %c0_i32_0 : i32, i32
  }
  func.func @transform_6(%arg0: i32) -> (i32, i32) {
    %c0_i32 = arith.constant 0 : i32
    %c0_i32_0 = arith.constant 0 : i32
    %c0_i32_1 = arith.constant 0 : i32
    return %c0_i32, %c0_i32_0 : i32, i32
  }
  func.func @transform_7(%arg0: i32) -> (i32, i32) {
    %c0_i32 = arith.constant 0 : i32
    %c0_i32_0 = arith.constant 0 : i32
    %c0_i32_1 = arith.constant 0 : i32
    return %c0_i32, %c0_i32_0 : i32, i32
  }
  func.func @transform_8(%arg0: i32) -> (i32, i32) {
    %c0_i32 = arith.constant 0 : i32
    %c0_i32_0 = arith.constant 0 : i32
    %c0_i32_1 = arith.constant 0 : i32
    return %c0_i32, %c0_i32_0 : i32, i32
  }
  func.func @transform_9(%arg0: i32) -> (i32, i32) {
    %c0_i32 = arith.constant 0 : i32
    %c0_i32_0 = arith.constant 0 : i32
    %c0_i32_1 = arith.constant 0 : i32
    return %c0_i32, %c0_i32_0 : i32, i32
  }
  func.func @transform_10(%arg0: i32) -> (i32, i32) {
    %c0_i32 = arith.constant 0 : i32
    %c0_i32_0 = arith.constant 0 : i32
    %c0_i32_1 = arith.constant 0 : i32
    return %c0_i32, %c0_i32_0 : i32, i32
  }
  func.func @transform_11(%arg0: i32) -> (i32, i32) {
    %c0_i32 = arith.constant 0 : i32
    %c0_i32_0 = arith.constant 0 : i32
    %c0_i32_1 = arith.constant 0 : i32
    return %c0_i32, %c0_i32_0 : i32, i32
  }
  func.func @transform_12(%arg0: i32) -> (i32, i32) {
    %c0_i32 = arith.constant 0 : i32
    %c0_i32_0 = arith.constant 0 : i32
    %c0_i32_1 = arith.constant 0 : i32
    return %c0_i32, %c0_i32_0 : i32, i32
  }
  func.func @transform_13(%arg0: i32) -> (i32, i32) {
    %c0_i32 = arith.constant 0 : i32
    %c0_i32_0 = arith.constant 0 : i32
    %c0_i32_1 = arith.constant 0 : i32
    return %c0_i32, %c0_i32_0 : i32, i32
  }
  func.func @transform_14(%arg0: i32) -> (i32, i32) {
    %c0_i32 = arith.constant 0 : i32
    %c0_i32_0 = arith.constant 0 : i32
    %c0_i32_1 = arith.constant 0 : i32
    return %c0_i32, %c0_i32_0 : i32, i32
  }
  func.func @transform_15(%arg0: i32) -> (i32, i32) {
    %c0_i32 = arith.constant 0 : i32
    %c0_i32_0 = arith.constant 0 : i32
    %c0_i32_1 = arith.constant 0 : i32
    return %c0_i32, %c0_i32_0 : i32, i32
  }
  func.func @transform_16(%arg0: i32) -> (i32, i32) {
    %c0_i32 = arith.constant 0 : i32
    %c0_i32_0 = arith.constant 0 : i32
    %c0_i32_1 = arith.constant 0 : i32
    return %c0_i32, %c0_i32_0 : i32, i32
  }
  func.func @transform_17(%arg0: i32) -> (i32, i32) {
    %c0_i32 = arith.constant 0 : i32
    %c0_i32_0 = arith.constant 0 : i32
    %c0_i32_1 = arith.constant 0 : i32
    return %c0_i32, %c0_i32_0 : i32, i32
  }
  func.func @transform_18(%arg0: i32) -> (i32, i32) {
    %c0_i32 = arith.constant 0 : i32
    %c0_i32_0 = arith.constant 0 : i32
    %c0_i32_1 = arith.constant 0 : i32
    return %c0_i32, %c0_i32_0 : i32, i32
  }
  func.func @transform_19(%arg0: i32) -> (i32, i32) {
    %c0_i32 = arith.constant 0 : i32
    %c0_i32_0 = arith.constant 0 : i32
    %c0_i32_1 = arith.constant 0 : i32
    return %c0_i32, %c0_i32_0 : i32, i32
  }
  func.func @transform_20(%arg0: i32) -> (i32, i32) {
    %c0_i32 = arith.constant 0 : i32
    %c0_i32_0 = arith.constant 0 : i32
    %c0_i32_1 = arith.constant 0 : i32
    return %c0_i32, %c0_i32_0 : i32, i32
  }
  func.func @transform_21(%arg0: i32) -> (i32, i32) {
    %c0_i32 = arith.constant 0 : i32
    %c0_i32_0 = arith.constant 0 : i32
    %c0_i32_1 = arith.constant 0 : i32
    return %c0_i32, %c0_i32_0 : i32, i32
  }
  func.func @transform_22(%arg0: i32) -> (i32, i32) {
    %c0_i32 = arith.constant 0 : i32
    %c0_i32_0 = arith.constant 0 : i32
    %c0_i32_1 = arith.constant 0 : i32
    return %c0_i32, %c0_i32_0 : i32, i32
  }
  func.func @transform_23(%arg0: i32) -> (i32, i32) {
    %c0_i32 = arith.constant 0 : i32
    %c0_i32_0 = arith.constant 0 : i32
    %c0_i32_1 = arith.constant 0 : i32
    return %c0_i32, %c0_i32_0 : i32, i32
  }
  func.func @transform_24(%arg0: i32) -> (i32, i32) {
    %c0_i32 = arith.constant 0 : i32
    %c0_i32_0 = arith.constant 0 : i32
    %c0_i32_1 = arith.constant 0 : i32
    return %c0_i32, %c0_i32_0 : i32, i32
  }
  func.func @transform_25(%arg0: i32) -> (i32, i32) {
    %c0_i32 = arith.constant 0 : i32
    %c0_i32_0 = arith.constant 0 : i32
    %c0_i32_1 = arith.constant 0 : i32
    return %c0_i32, %c0_i32_0 : i32, i32
  }
  func.func @transform_26(%arg0: i32) -> (i32, i32) {
    %c0_i32 = arith.constant 0 : i32
    %c0_i32_0 = arith.constant 0 : i32
    %c0_i32_1 = arith.constant 0 : i32
    return %c0_i32, %c0_i32_0 : i32, i32
  }
  func.func @transform_27(%arg0: i32) -> (i32, i32) {
    %c0_i32 = arith.constant 0 : i32
    %c0_i32_0 = arith.constant 0 : i32
    %c0_i32_1 = arith.constant 0 : i32
    return %c0_i32, %c0_i32_0 : i32, i32
  }
}

</mosaic_0001>

<llo_original>
// kernel: tpu_custom_call.1
$region0: #{tpu_custom_call.1}
  #allocation0 [shape = 'u32[]', space=smem, size = 0x4, offset = 0x4, fixed_abs, tag = 'smem constant byte address 0x4 - core index']
  #allocation1 [shape = 'u32[144,128]{1,0:T(1,128)}', space=vmem, size = 0x12000, scoped, tag = 'internal scratch']
  %s0 = inlined_call_operand.vmem [shape: bf16[128,128], index: 0, kind: input, shape index: {}]
  %s1 = inlined_call_operand.vmem [shape: f32[128,16], index: 1, kind: input, shape index: {}]
  %s2 = inlined_call_operand.vmem [shape: bf16[4,128], index: 2, kind: input, shape index: {}]
  %s3 = inlined_call_operand.vmem [shape: f32[4,1], index: 3, kind: input, shape index: {}]
  %s4 = inlined_call_operand.vmem [shape: f32[3], index: 4, kind: input, shape index: {}]
  %s5 = inlined_call_operand.vmem [shape: bf16[16,128], index: 5, kind: input, shape index: {}]
  %s6 = inlined_call_operand.vmem [shape: f32[1,128], index: 6, kind: input, shape index: {}]
  %s7 = inlined_call_operand.hbm [shape: bf16[128,128], index: 7, kind: input, shape index: {}]
  %s8 = inlined_call_operand.vmem [shape: f32[1,128], index: 8, kind: input, shape index: {}]
  %s9 = inlined_call_operand.vmem [shape: f32[1,128], index: 9, kind: input, shape index: {}]
  %s10 = inlined_call_operand.vmem [shape: f32[1,128], index: 10, kind: input, shape index: {}]
  %s11 = inlined_call_operand.hbm [shape: bf16[128,128], index: 11, kind: input, shape index: {}]
  %s12 = inlined_call_operand.vmem [shape: f32[1,128], index: 12, kind: input, shape index: {}]
  %s13 = inlined_call_operand.hbm [shape: bf16[128,128], index: 13, kind: input, shape index: {}]
  %s14 = inlined_call_operand.vmem [shape: f32[1,128], index: 14, kind: input, shape index: {}]
  %s15 = inlined_call_operand.vmem [shape: f32[1,128], index: 15, kind: input, shape index: {}]
  %s16 = inlined_call_operand.vmem [shape: f32[1,128], index: 16, kind: input, shape index: {}]
  %s17 = inlined_call_operand.hbm [shape: bf16[128,128], index: 17, kind: input, shape index: {}]
  %s18 = inlined_call_operand.vmem [shape: f32[1,128], index: 18, kind: input, shape index: {}]
  %s19 = inlined_call_operand.hbm [shape: bf16[128,128], index: 19, kind: input, shape index: {}]
  %s20 = inlined_call_operand.vmem [shape: f32[1,128], index: 20, kind: input, shape index: {}]
  %s21 = inlined_call_operand.vmem [shape: f32[1,128], index: 21, kind: input, shape index: {}]
  %s22 = inlined_call_operand.vmem [shape: f32[1,128], index: 22, kind: input, shape index: {}]
  %s23 = inlined_call_operand.vmem [shape: bf16[384,128], index: 23, kind: input, shape index: {}]
  %s24 = inlined_call_operand.vmem [shape: f32[1,128], index: 24, kind: input, shape index: {}]
  %s25 = inlined_call_operand.vmem [shape: bf16[128,8], index: 25, kind: input, shape index: {}]
  %s26 = inlined_call_operand.vmem [shape: f32[1,8], index: 26, kind: input, shape index: {}]
  %s27 = inlined_call_operand.hbm [shape: f32[4,8], index: 27, kind: output, shape index: {}]
  %s28 = sld [smem:[#allocation0]]
  $region142: #{tpu_custom_call.1} parent=0
    _
  %s30 = ssub.s32 1, %s28
  %s31 = scalar_select 0, %s30, %s28
  $region1: #{tpu_custom_call.1} parent=0
    #allocation2 [shape = 'u8[512]{0}', space=smem, size = 0x200, scoped, tag = 'input window, operand 4, single buffered']
    #allocation3 [shape = 's32[1]{0}', space=sflag, size = 0x4, scoped, tag = 'scoped memory for tpu_custom_call.1']
    #allocation4 [shape = 's32[1]{0}', space=sflag, size = 0x4, scoped, tag = 'scoped memory for tpu_custom_call.1']
    #allocation5 [shape = 's32[1]{0}', space=sflag, size = 0x4, scoped, tag = 'scoped memory for tpu_custom_call.1']
    #allocation6 [shape = 'u8[32768]{0}', space=vmem, size = 0x8000, scoped, tag = 'input window, operand 7, single buffered']
    #allocation7 [shape = 'u8[32768]{0}', space=vmem, size = 0x8000, scoped, tag = 'input window, operand 11, single buffered']
    #allocation8 [shape = 's32[1]{0}', space=sflag, size = 0x4, scoped, tag = 'scoped memory for tpu_custom_call.1']
    #allocation9 [shape = 'u8[32768]{0}', space=vmem, size = 0x8000, scoped, tag = 'input window, operand 13, single buffered']
    #allocation10 [shape = 'u8[32768]{0}', space=vmem, size = 0x8000, scoped, tag = 'input window, operand 17, single buffered']
    #allocation11 [shape = 's32[1]{0}', space=sflag, size = 0x4, scoped, tag = 'scoped memory for tpu_custom_call.1']
    #allocation12 [shape = 'u8[32768]{0}', space=vmem, size = 0x8000, scoped, tag = 'input window, operand 19, single buffered']
    #allocation13 [shape = 'u8[2048]{0}', space=vmem, size = 0x800, scoped, tag = 'output window, operand 0, single buffered']
    %32 = vsyncpa [#allocation5], 0
    %33 = vsyncpa [#allocation3], 0
    %34 = vsyncpa [#allocation8], 0
    %35 = vsyncpa [#allocation11], 0
    %36 = vsyncpa [#allocation4], 0
    // Predicated region
    $region2: #{tpu_custom_call.1} parent=1 // pred_check
      _
    $region3: #{tpu_custom_call.1} parent=1 // pred_check_branch
      %38 = sbr.rel (0) target = $region5
    $region4: #{tpu_custom_call.1} parent=1 // pred_region
      _
    $region5: #{tpu_custom_call.1} parent=1 // pred_fallthru
      _
    // Predicated region
    $region6: #{tpu_custom_call.1} parent=1 // pred_check
      _
    $region7: #{tpu_custom_call.1} parent=1 // pred_check_branch
      %40 = sbr.rel (0) target = $region9
    $region8: #{tpu_custom_call.1} parent=1 // pred_region
      _
    $region9: #{tpu_custom_call.1} parent=1 // pred_fallthru
      _
    // Predicated region
    $region10: #{tpu_custom_call.1} parent=1 // pred_check
      _
    $region11: #{tpu_custom_call.1} parent=1 // pred_check_branch
      %42 = sbr.rel (0) target = $region13
    $region12: #{tpu_custom_call.1} parent=1 // pred_region
      _
    $region13: #{tpu_custom_call.1} parent=1 // pred_fallthru
      _
    // Predicated region
    $region14: #{tpu_custom_call.1} parent=1 // pred_check
      _
    $region15: #{tpu_custom_call.1} parent=1 // pred_check_branch
      %44 = sbr.rel (0) target = $region17
    $region16: #{tpu_custom_call.1} parent=1 // pred_region
      _
    $region17: #{tpu_custom_call.1} parent=1 // pred_fallthru
      _
    // Predicated region
    $region18: #{tpu_custom_call.1} parent=1 // pred_check
      _
    $region19: #{tpu_custom_call.1} parent=1 // pred_check_branch
      %46 = sbr.rel (0) target = $region21
    $region20: #{tpu_custom_call.1} parent=1 // pred_region
      %s48 = ssub.s32 16, 16
      %49 = vsyncadd [#allocation5], %s48
      %s51 = sshll.u32 %s4, 4
      %s52 = int_to_ptr.vmem [resolvable:$true] %s51
      %54 = dma.vmem_to_smem %s52, 16, [#allocation2], [#allocation5]
    $region21: #{tpu_custom_call.1} parent=1 // pred_fallthru
      _
    // Predicated region
    $region22: #{tpu_custom_call.1} parent=1 // pred_check
      _
    $region23: #{tpu_custom_call.1} parent=1 // pred_check_branch
      %56 = sbr.rel (0) target = $region25
    $region24: #{tpu_custom_call.1} parent=1 // pred_region
      _
    $region25: #{tpu_custom_call.1} parent=1 // pred_fallthru
      _
    // Predicated region
    $region26: #{tpu_custom_call.1} parent=1 // pred_check
      _
    $region27: #{tpu_custom_call.1} parent=1 // pred_check_branch
      %58 = sbr.rel (0) target = $region29
    $region28: #{tpu_custom_call.1} parent=1 // pred_region
      _
    $region29: #{tpu_custom_call.1} parent=1 // pred_fallthru
      _
    // Predicated region
    $region30: #{tpu_custom_call.1} parent=1 // pred_check
      _
    $region31: #{tpu_custom_call.1} parent=1 // pred_check_branch
      %60 = sbr.rel (0) target = $region33
    $region32: #{tpu_custom_call.1} parent=1 // pred_region
      %s62 = ssub.s32 1024, 1024
      %63 = vsyncadd [#allocation3], %s62
      %s64 = sshll.u32 [#allocation6], 4
      %s65 = int_to_ptr.vmem [resolvable:$true] %s64
      %70 = dma.hbm_to_vmem [thread:$0]  %s7, 1024, %s65, [#allocation3], 64, 64, 4
    $region33: #{tpu_custom_call.1} parent=1 // pred_fallthru
      _
    // Predicated region
    $region34: #{tpu_custom_call.1} parent=1 // pred_check
      _
    $region35: #{tpu_custom_call.1} parent=1 // pred_check_branch
      %72 = sbr.rel (0) target = $region37
    $region36: #{tpu_custom_call.1} parent=1 // pred_region
      _
    $region37: #{tpu_custom_call.1} parent=1 // pred_fallthru
      _
    // Predicated region
    $region38: #{tpu_custom_call.1} parent=1 // pred_check
      _
    $region39: #{tpu_custom_call.1} parent=1 // pred_check_branch
      %74 = sbr.rel (0) target = $region41
    $region40: #{tpu_custom_call.1} parent=1 // pred_region
      _
    $region41: #{tpu_custom_call.1} parent=1 // pred_fallthru
      _
    // Predicated region
    $region42: #{tpu_custom_call.1} parent=1 // pred_check
      _
    $region43: #{tpu_custom_call.1} parent=1 // pred_check_branch
      %76 = sbr.rel (0) target = $region45
    $region44: #{tpu_custom_call.1} parent=1 // pred_region
      _
    $region45: #{tpu_custom_call.1} parent=1 // pred_fallthru
      _
    // Predicated region
    $region46: #{tpu_custom_call.1} parent=1 // pred_check
      _
    $region47: #{tpu_custom_call.1} parent=1 // pred_check_branch
      %78 = sbr.rel (0) target = $region49
    $region48: #{tpu_custom_call.1} parent=1 // pred_region
      %s80 = ssub.s32 1024, 1024
      %81 = vsyncadd [#allocation8], %s80
      %s82 = sshll.u32 [#allocation7], 4
      %s83 = int_to_ptr.vmem [resolvable:$true] %s82
      %88 = dma.hbm_to_vmem [thread:$0]  %s11, 1024, %s83, [#allocation8], 64, 64, 4
    $region49: #{tpu_custom_call.1} parent=1 // pred_fallthru
      _
    // Predicated region
    $region50: #{tpu_custom_call.1} parent=1 // pred_check
      _
    $region51: #{tpu_custom_call.1} parent=1 // pred_check_branch
      %90 = sbr.rel (0) target = $region53
    $region52: #{tpu_custom_call.1} parent=1 // pred_region
      _
    $region53: #{tpu_custom_call.1} parent=1 // pred_fallthru
      _
    // Predicated region
    $region54: #{tpu_custom_call.1} parent=1 // pred_check
      _
    $region55: #{tpu_custom_call.1} parent=1 // pred_check_branch
      %92 = sbr.rel (0) target = $region57
    $region56: #{tpu_custom_call.1} parent=1 // pred_region
      %s94 = ssub.s32 1024, 1024
      %95 = vsyncadd [#allocation8], %s94
      %s96 = sshll.u32 [#allocation9], 4
      %s97 = int_to_ptr.vmem [resolvable:$true] %s96
      %102 = dma.hbm_to_vmem [thread:$0]  %s13, 1024, %s97, [#allocation8], 64, 64, 4
    $region57: #{tpu_custom_call.1} parent=1 // pred_fallthru
      _
    // Predicated region
    $region58: #{tpu_custom_call.1} parent=1 // pred_check
      _
    $region59: #{tpu_custom_call.1} parent=1 // pred_check_branch
      %104 = sbr.rel (0) target = $region61
    $region60: #{tpu_custom_call.1} parent=1 // pred_region
      _
    $region61: #{tpu_custom_call.1} parent=1 // pred_fallthru
      _
    // Predicated region
    $region62: #{tpu_custom_call.1} parent=1 // pred_check
      _
    $region63: #{tpu_custom_call.1} parent=1 // pred_check_branch
      %106 = sbr.rel (0) target = $region65
    $region64: #{tpu_custom_call.1} parent=1 // pred_region
      _
    $region65: #{tpu_custom_call.1} parent=1 // pred_fallthru
      _
    // Predicated region
    $region66: #{tpu_custom_call.1} parent=1 // pred_check
      _
    $region67: #{tpu_custom_call.1} parent=1 // pred_check_branch
      %108 = sbr.rel (0) target = $region69
    $region68: #{tpu_custom_call.1} parent=1 // pred_region
      _
    $region69: #{tpu_custom_call.1} parent=1 // pred_fallthru
      _
    // Predicated region
    $region70: #{tpu_custom_call.1} parent=1 // pred_check
      _
    $region71: #{tpu_custom_call.1} parent=1 // pred_check_branch
      %110 = sbr.rel (0) target = $region73
    $region72: #{tpu_custom_call.1} parent=1 // pred_region
      %s112 = ssub.s32 1024, 1024
      %113 = vsyncadd [#allocation11], %s112
      %s114 = sshll.u32 [#allocation10], 4
      %s115 = int_to_ptr.vmem [resolvable:$true] %s114
      %120 = dma.hbm_to_vmem [thread:$0]  %s17, 1024, %s115, [#allocation11], 64, 64, 4
    $region73: #{tpu_custom_call.1} parent=1 // pred_fallthru
      _
    // Predicated region
    $region74: #{tpu_custom_call.1} parent=1 // pred_check
      _
    $region75: #{tpu_custom_call.1} parent=1 // pred_check_branch
      %122 = sbr.rel (0) target = $region77
    $region76: #{tpu_custom_call.1} parent=1 // pred_region
      _
    $region77: #{tpu_custom_call.1} parent=1 // pred_fallthru
      _
    // Predicated region
    $region78: #{tpu_custom_call.1} parent=1 // pred_check
      _
    $region79: #{tpu_custom_call.1} parent=1 // pred_check_branch
      %124 = sbr.rel (0) target = $region81
    $region80: #{tpu_custom_call.1} parent=1 // pred_region
      %s126 = ssub.s32 1024, 1024
      %127 = vsyncadd [#allocation11], %s126
      %s128 = sshll.u32 [#allocation12], 4
      %s129 = int_to_ptr.vmem [resolvable:$true] %s128
      %134 = dma.hbm_to_vmem [thread:$0]  %s19, 1024, %s129, [#allocation11], 64, 64, 4
    $region81: #{tpu_custom_call.1} parent=1 // pred_fallthru
      _
    // Predicated region
    $region82: #{tpu_custom_call.1} parent=1 // pred_check
      _
    $region83: #{tpu_custom_call.1} parent=1 // pred_check_branch
      %136 = sbr.rel (0) target = $region85
    $region84: #{tpu_custom_call.1} parent=1 // pred_region
      _
    $region85: #{tpu_custom_call.1} parent=1 // pred_fallthru
      _
    // Predicated region
    $region86: #{tpu_custom_call.1} parent=1 // pred_check
      _
    $region87: #{tpu_custom_call.1} parent=1 // pred_check_branch
      %138 = sbr.rel (0) target = $region89
    $region88: #{tpu_custom_call.1} parent=1 // pred_region
      _
    $region89: #{tpu_custom_call.1} parent=1 // pred_fallthru
      _
    // Predicated region
    $region90: #{tpu_custom_call.1} parent=1 // pred_check
      _
    $region91: #{tpu_custom_call.1} parent=1 // pred_check_branch
      %140 = sbr.rel (0) target = $region93
    $region92: #{tpu_custom_call.1} parent=1 // pred_region
      _
    $region93: #{tpu_custom_call.1} parent=1 // pred_fallthru
      _
    // Predicated region
    $region94: #{tpu_custom_call.1} parent=1 // pred_check
      _
    $region95: #{tpu_custom_call.1} parent=1 // pred_check_branch
      %142 = sbr.rel (0) target = $region97
    $region96: #{tpu_custom_call.1} parent=1 // pred_region
      _
    $region97: #{tpu_custom_call.1} parent=1 // pred_fallthru
      _
    // Predicated region
    $region98: #{tpu_custom_call.1} parent=1 // pred_check
      _
    $region99: #{tpu_custom_call.1} parent=1 // pred_check_branch
      %144 = sbr.rel (0) target = $region101
    $region100: #{tpu_custom_call.1} parent=1 // pred_region
      _
    $region101: #{tpu_custom_call.1} parent=1 // pred_fallthru
      _
    // Predicated region
    $region102: #{tpu_custom_call.1} parent=1 // pred_check
      _
    $region103: #{tpu_custom_call.1} parent=1 // pred_check_branch
      %146 = sbr.rel (0) target = $region105
    $region104: #{tpu_custom_call.1} parent=1 // pred_region
      _
    $region105: #{tpu_custom_call.1} parent=1 // pred_fallthru
      _
    // Predicated region
    $region106: #{tpu_custom_call.1} parent=1 // pred_check
      _
    $region107: #{tpu_custom_call.1} parent=1 // pred_check_branch
      %148 = sbr.rel (0) target = $region109
    $region108: #{tpu_custom_call.1} parent=1 // pred_region
      _
    $region109: #{tpu_custom_call.1} parent=1 // pred_fallthru
      _
    // Predicated region
    $region110: #{tpu_custom_call.1} parent=1 // pred_check
      _
    $region111: #{tpu_custom_call.1} parent=1 // pred_check_branch
      %150 = sbr.rel (0) target = $region113
    $region112: #{tpu_custom_call.1} parent=1 // pred_region
      %151 = dma.done [#allocation5], 16
    $region113: #{tpu_custom_call.1} parent=1 // pred_fallthru
      _
    // Predicated region
    $region114: #{tpu_custom_call.1} parent=1 // pred_check
      _
    $region115: #{tpu_custom_call.1} parent=1 // pred_check_branch
      %153 = sbr.rel (0) target = $region117
    $region116: #{tpu_custom_call.1} parent=1 // pred_region
      %154 = dma.done [#allocation3], 1024
    $region117: #{tpu_custom_call.1} parent=1 // pred_fallthru
      _
    // Predicated region
    $region118: #{tpu_custom_call.1} parent=1 // pred_check
      _
    $region119: #{tpu_custom_call.1} parent=1 // pred_check_branch
      %156 = sbr.rel (0) target = $region121
    $region120: #{tpu_custom_call.1} parent=1 // pred_region
      %157 = dma.done [#allocation8], 1024
    $region121: #{tpu_custom_call.1} parent=1 // pred_fallthru
      _
    // Predicated region
    $region122: #{tpu_custom_call.1} parent=1 // pred_check
      _
    $region123: #{tpu_custom_call.1} parent=1 // pred_check_branch
      %159 = sbr.rel (0) target = $region125
    $region124: #{tpu_custom_call.1} parent=1 // pred_region
      %160 = dma.done [#allocation8], 1024
    $region125: #{tpu_custom_call.1} parent=1 // pred_fallthru
      _
    // Predicated region
    $region126: #{tpu_custom_call.1} parent=1 // pred_check
      _
    $region127: #{tpu_custom_call.1} parent=1 // pred_check_branch
      %162 = sbr.rel (0) target = $region129
    $region128: #{tpu_custom_call.1} parent=1 // pred_region
      %163 = dma.done [#allocation11], 1024
    $region129: #{tpu_custom_call.1} parent=1 // pred_fallthru
      _
    // Predicated region
    $region130: #{tpu_custom_call.1} parent=1 // pred_check
      _
    $region131: #{tpu_custom_call.1} parent=1 // pred_check_branch
      %165 = sbr.rel (0) target = $region133
    $region132: #{tpu_custom_call.1} parent=1 // pred_region
      %166 = dma.done [#allocation11], 1024
    $region133: #{tpu_custom_call.1} parent=1 // pred_fallthru
      _
    %167 = sfence
    %v169 = vld [vmem:[%s0] sm:$0xf]
    %v170 = vld [vmem:[%s0 + $0x4] sm:$0xf]
    %v171 = vld [vmem:[%s0 + $0x8] sm:$0xf]
    %v172 = vld [vmem:[%s0 + $0xc] sm:$0xf]
    %v173 = vld [vmem:[%s0 + $0x10] sm:$0xf]
    %v174 = vld [vmem:[%s0 + $0x14] sm:$0xf]
    %v175 = vld [vmem:[%s0 + $0x18] sm:$0xf]
    %v176 = vld [vmem:[%s0 + $0x1c] sm:$0xf]
    %v177 = vld [vmem:[%s0 + $0x20] sm:$0xf]
    %v178 = vld [vmem:[%s0 + $0x24] sm:$0xf]
    %v179 = vld [vmem:[%s0 + $0x28] sm:$0xf]
    %v180 = vld [vmem:[%s0 + $0x2c] sm:$0xf]
    %v181 = vld [vmem:[%s0 + $0x30] sm:$0xf]
    %v182 = vld [vmem:[%s0 + $0x34] sm:$0xf]
    %v183 = vld [vmem:[%s0 + $0x38] sm:$0xf]
    %v184 = vld [vmem:[%s0 + $0x3c] sm:$0xf]
    %v185 = vld [vmem:[%s2] sm:$0x3]
    %v186 = vld [vmem:[%s3] sm:$0xf]
    %v187 = vld [vmem:[%s1] sm:$0xff]
    %v188 = vld [vmem:[%s1 + $0x8] sm:$0xff]
    %v189 = vld [vmem:[%s1 + $0x10] sm:$0xff]
    %v190 = vld [vmem:[%s1 + $0x18] sm:$0xff]
    %v191 = vld [vmem:[%s1 + $0x20] sm:$0xff]
    %v192 = vld [vmem:[%s1 + $0x28] sm:$0xff]
    %v193 = vld [vmem:[%s1 + $0x30] sm:$0xff]
    %v194 = vld [vmem:[%s1 + $0x38] sm:$0xff]
    %v195 = vld [vmem:[%s1 + $0x40] sm:$0xff]
    %v196 = vld [vmem:[%s1 + $0x48] sm:$0xff]
    %v197 = vld [vmem:[%s1 + $0x50] sm:$0xff]
    %v198 = vld [vmem:[%s1 + $0x58] sm:$0xff]
    %v199 = vld [vmem:[%s1 + $0x60] sm:$0xff]
    %v200 = vld [vmem:[%s1 + $0x68] sm:$0xff]
    %v201 = vld [vmem:[%s1 + $0x70] sm:$0xff]
    %v202 = vld [vmem:[%s1 + $0x78] sm:$0xff]
    %v203 = vpack.c.bf16 %v188, %v187
    %v204 = vpack.c.bf16 %v190, %v189
    %v205 = vpack.c.bf16 %v192, %v191
    %v206 = vpack.c.bf16 %v194, %v193
    %v207 = vpack.c.bf16 %v196, %v195
    %v208 = vpack.c.bf16 %v198, %v197
    %v209 = vpack.c.bf16 %v200, %v199
    %v210 = vpack.c.bf16 %v202, %v201
    %s211 = sld [smem:[#allocation2]]
    %s212 = sadd.f32 %s211, 1.0
    %v213 = vstv %s212
    %v214 = vmul.f32 %v213, %v187
    %v215 = vmul.f32 %v213, %v188
    %v216 = vmul.f32 %v213, %v189
    %v217 = vmul.f32 %v213, %v190
    %v218 = vmul.f32 %v213, %v191
    %v219 = vmul.f32 %v213, %v192
    %v220 = vmul.f32 %v213, %v193
    %v221 = vmul.f32 %v213, %v194
    %v222 = vmul.f32 %v213, %v195
    %v223 = vmul.f32 %v213, %v196
    %v224 = vmul.f32 %v213, %v197
    %v225 = vmul.f32 %v213, %v198
    %v226 = vmul.f32 %v213, %v199
    %v227 = vmul.f32 %v213, %v200
    %v228 = vmul.f32 %v213, %v201
    %v229 = vmul.f32 %v213, %v202
    %v246 = vunpack.c.l.b16 %v169
    %v247 = vunpack.c.l.b16 %v170
    %v248 = vunpack.c.l.b16 %v171
    %v249 = vunpack.c.l.b16 %v172
    %v250 = vunpack.c.l.b16 %v173
    %v251 = vunpack.c.l.b16 %v174
    %v252 = vunpack.c.l.b16 %v175
    %v253 = vunpack.c.l.b16 %v176
    %v254 = vunpack.c.l.b16 %v177
    %v255 = vunpack.c.l.b16 %v178
    %v256 = vunpack.c.l.b16 %v179
    %v257 = vunpack.c.l.b16 %v180
    %v258 = vunpack.c.l.b16 %v181
    %v259 = vunpack.c.l.b16 %v182
    %v260 = vunpack.c.l.b16 %v183
    %v261 = vunpack.c.l.b16 %v184
    %v262 = vpack.c.b16 %v247, %v246
    %v263 = vpack.c.b16 %v249, %v248
    %v264 = vpack.c.b16 %v251, %v250
    %v265 = vpack.c.b16 %v253, %v252
    %v266 = vpack.c.b16 %v255, %v254
    %v267 = vpack.c.b16 %v257, %v256
    %v268 = vpack.c.b16 %v259, %v258
    %v269 = vpack.c.b16 %v261, %v260
    %278 = vmatprep.subr.bf16.mxu0 0
    %279 = vmatpush1.bf16.msra.mxu0 %v203
    %280 = vmatprep.subr.bf16.mxu0 0
    %281 = vmatpush1.bf16.msra.mxu0 %v204
    %282 = vmatprep.subr.bf16.mxu0 0
    %283 = vmatpush1.bf16.msra.mxu0 %v205
    %284 = vmatprep.subr.bf16.mxu0 0
    %285 = vmatpush1.bf16.msra.mxu0 %v206
    %286 = vmatprep.subr.bf16.mxu0 0
    %287 = vmatpush1.bf16.msra.mxu0 %v207
    %288 = vmatprep.subr.bf16.mxu0 0
    %289 = vmatpush1.bf16.msra.mxu0 %v208
    %290 = vmatprep.subr.bf16.mxu0 0
    %291 = vmatpush1.bf16.msra.mxu0 %v209
    %292 = vmatprep.subr.bf16.mxu0 0
    %293 = vmatpush1.bf16.msra.mxu0 %v210
    %294 = vmatprep.subr.bf16.mxu0 0
    %295 = vmatpush1.bf16.msra.mxu0 0
    %296 = vmatprep.subr.bf16.mxu0 0
    %297 = vmatpush1.bf16.msra.mxu0 0
    %298 = vmatprep.subr.bf16.mxu0 0
    %299 = vmatpush1.bf16.msra.mxu0 0
    %300 = vmatprep.subr.bf16.mxu0 0
    %301 = vmatpush1.bf16.msra.mxu0 0
    %302 = vmatprep.subr.bf16.mxu0 0
    %303 = vmatpush1.bf16.msra.mxu0 0
    %304 = vmatprep.subr.bf16.mxu0 0
    %305 = vmatpush1.bf16.msra.mxu0 0
    %306 = vmatprep.subr.bf16.mxu0 0
    %307 = vmatpush1.bf16.msra.mxu0 0
    %308 = vmatprep.subr.bf16.mxu0 0
    %309 = vmatpush1.bf16.msra.mxu0 0
    %310 = vmatprep.mubr.bf16.mxu0 0
    %311 = vmatmul.mubr.bf16.gmra.mrb[0].mxu0 %v262
    %v312 = vpop.f32.mrb[0].mxu0
    %v313 = vadd.f32 %v214, %v312
    %v314 = vpop.f32.mrb[0].mxu0
    %v315 = vpop.f32.mrb[0].mxu0
    %v316 = vadd.f32 %v215, %v315
    %v317 = vpop.f32.mrb[0].mxu0
    %318 = vmatprep.mubr.bf16.mxu0 0
    %319 = vmatmul.mubr.bf16.gmra.mrb[0].mxu0 %v263
    %v320 = vpop.f32.mrb[0].mxu0
    %v321 = vadd.f32 %v216, %v320
    %v322 = vpop.f32.mrb[0].mxu0
    %v323 = vpop.f32.mrb[0].mxu0
    %v324 = vadd.f32 %v217, %v323
    %v325 = vpop.f32.mrb[0].mxu0
    %326 = vmatprep.mubr.bf16.mxu0 0
    %327 = vmatmul.mubr.bf16.gmra.mrb[0].mxu0 %v264
    %v328 = vpop.f32.mrb[0].mxu0
    %v329 = vadd.f32 %v218, %v328
    %v330 = vpop.f32.mrb[0].mxu0
    %v331 = vpop.f32.mrb[0].mxu0
    %v332 = vadd.f32 %v219, %v331
    %v333 = vpop.f32.mrb[0].mxu0
    %334 = vmatprep.mubr.bf16.mxu0 0
    %335 = vmatmul.mubr.bf16.gmra.mrb[0].mxu0 %v265
    %v336 = vpop.f32.mrb[0].mxu0
    %v337 = vadd.f32 %v220, %v336
    %v338 = vpop.f32.mrb[0].mxu0
    %v339 = vpop.f32.mrb[0].mxu0
    %v340 = vadd.f32 %v221, %v339
    %v341 = vpop.f32.mrb[0].mxu0
    %342 = vmatprep.mubr.bf16.mxu0 0
    %343 = vmatmul.mubr.bf16.gmra.mrb[0].mxu0 %v266
    %v344 = vpop.f32.mrb[0].mxu0
    %v345 = vadd.f32 %v222, %v344
    %v346 = vpop.f32.mrb[0].mxu0
    %v347 = vpop.f32.mrb[0].mxu0
    %v348 = vadd.f32 %v223, %v347
    %v349 = vpop.f32.mrb[0].mxu0
    %350 = vmatprep.mubr.bf16.mxu0 0
    %351 = vmatmul.mubr.bf16.gmra.mrb[0].mxu0 %v267
    %v352 = vpop.f32.mrb[0].mxu0
    %v353 = vadd.f32 %v224, %v352
    %v354 = vpop.f32.mrb[0].mxu0
    %v355 = vpop.f32.mrb[0].mxu0
    %v356 = vadd.f32 %v225, %v355
    %v357 = vpop.f32.mrb[0].mxu0
    %358 = vmatprep.mubr.bf16.mxu0 0
    %359 = vmatmul.mubr.bf16.gmra.mrb[0].mxu0 %v268
    %v360 = vpop.f32.mrb[0].mxu0
    %v361 = vadd.f32 %v226, %v360
    %v362 = vpop.f32.mrb[0].mxu0
    %v363 = vpop.f32.mrb[0].mxu0
    %v364 = vadd.f32 %v227, %v363
    %v365 = vpop.f32.mrb[0].mxu0
    %366 = vmatprep.mubr.bf16.mxu0 0
    %367 = vmatmul.mubr.bf16.gmra.mrb[0].mxu0 %v269
    %v368 = vpop.f32.mrb[0].mxu0
    %v369 = vadd.f32 %v228, %v368
    %v370 = vpop.f32.mrb[0].mxu0
    %v371 = vpop.f32.mrb[0].mxu0
    %v372 = vadd.f32 %v229, %v371
    %v373 = vpop.f32.mrb[0].mxu0
    %374 = vdwg.mxu0
    %v375 = vpack.c.bf16 %v316, %v313
    %v376 = vpack.c.bf16 %v324, %v321
    %v377 = vpack.c.bf16 %v332, %v329
    %v378 = vpack.c.bf16 %v340, %v337
    %v379 = vpack.c.bf16 %v348, %v345
    %v380 = vpack.c.bf16 %v356, %v353
    %v381 = vpack.c.bf16 %v364, %v361
    %v382 = vpack.c.bf16 %v372, %v369
    %v383 = vld [vmem:[%s5] sm:$0xf]
    %v384 = vld [vmem:[%s5 + $0x4] sm:$0xf]
    %v385 = vld [vmem:[%s6] sm:$0x1]
    %v387 = vlaneseq
    %v388 = vshrl.u32 %v387, 7
    %v389 = vsub.s32 0, %v388
    %v390 = vrot.slane %v385, %v389
    %v394 = vunpack.c.l.b16 %v383
    %v395 = vunpack.c.l.b16 %v384
    %v396 = vpack.c.b16 %v395, %v394
    %vm398 = vcmask 130048
    %v400 = vsel %vm398, %v375, 0
    %v403 = vsel %vm398, %v376, 0
    %v406 = vsel %vm398, %v377, 0
    %v409 = vsel %vm398, %v378, 0
    %v412 = vsel %vm398, %v379, 0
    %v415 = vsel %vm398, %v380, 0
    %v418 = vsel %vm398, %v381, 0
    %v421 = vsel %vm398, %v382, 0
    %423 = vmatprep.subr.bf16.mxu0 0
    %424 = vmatpush1.bf16.msra.mxu0 %v396
    %425 = vmatprep.subr.bf16.mxu0 0
    %426 = vmatpush1.bf16.msra.mxu0 0
    %427 = vmatprep.subr.bf16.mxu0 0
    %428 = vmatpush1.bf16.msra.mxu0 0
    %429 = vmatprep.subr.bf16.mxu0 0
    %430 = vmatpush1.bf16.msra.mxu0 0
    %431 = vmatprep.subr.bf16.mxu0 0
    %432 = vmatpush1.bf16.msra.mxu0 0
    %433 = vmatprep.subr.bf16.mxu0 0
    %434 = vmatpush1.bf16.msra.mxu0 0
    %435 = vmatprep.subr.bf16.mxu0 0
    %436 = vmatpush1.bf16.msra.mxu0 0
    %437 = vmatprep.subr.bf16.mxu0 0
    %438 = vmatpush1.bf16.msra.mxu0 0
    %439 = vmatprep.subr.bf16.mxu0 0
    %440 = vmatpush1.bf16.msra.mxu0 0
    %441 = vmatprep.subr.bf16.mxu0 0
    %442 = vmatpush1.bf16.msra.mxu0 0
    %443 = vmatprep.subr.bf16.mxu0 0
    %444 = vmatpush1.bf16.msra.mxu0 0
    %445 = vmatprep.subr.bf16.mxu0 0
    %446 = vmatpush1.bf16.msra.mxu0 0
    %447 = vmatprep.subr.bf16.mxu0 0
    %448 = vmatpush1.bf16.msra.mxu0 0
    %449 = vmatprep.subr.bf16.mxu0 0
    %450 = vmatpush1.bf16.msra.mxu0 0
    %451 = vmatprep.subr.bf16.mxu0 0
    %452 = vmatpush1.bf16.msra.mxu0 0
    %453 = vmatprep.subr.bf16.mxu0 0
    %454 = vmatpush1.bf16.msra.mxu0 0
    %455 = vmatprep.mubr.bf16.mxu0 0
    %456 = vmatmul.mubr.bf16.gmra.mrb[0].mxu0 %v400
    %v457 = vpop.f32.mrb[0].mxu0
    %v458 = vadd.f32 %v390, %v457
    %v459 = vpop.f32.mrb[0].mxu0
    %v460 = vpop.f32.mrb[0].mxu0
    %v461 = vadd.f32 %v390, %v460
    %v462 = vpop.f32.mrb[0].mxu0
    %463 = vmatprep.mubr.bf16.mxu0 0
    %464 = vmatmul.mubr.bf16.gmra.mrb[0].mxu0 %v403
    %v465 = vpop.f32.mrb[0].mxu0
    %v466 = vadd.f32 %v390, %v465
    %v467 = vpop.f32.mrb[0].mxu0
    %v468 = vpop.f32.mrb[0].mxu0
    %v469 = vadd.f32 %v390, %v468
    %v470 = vpop.f32.mrb[0].mxu0
    %471 = vmatprep.mubr.bf16.mxu0 0
    %472 = vmatmul.mubr.bf16.gmra.mrb[0].mxu0 %v406
    %v473 = vpop.f32.mrb[0].mxu0
    %v474 = vadd.f32 %v390, %v473
    %v475 = vpop.f32.mrb[0].mxu0
    %v476 = vpop.f32.mrb[0].mxu0
    %v477 = vadd.f32 %v390, %v476
    %v478 = vpop.f32.mrb[0].mxu0
    %479 = vmatprep.mubr.bf16.mxu0 0
    %480 = vmatmul.mubr.bf16.gmra.mrb[0].mxu0 %v409
    %v481 = vpop.f32.mrb[0].mxu0
    %v482 = vadd.f32 %v390, %v481
    %v483 = vpop.f32.mrb[0].mxu0
    %v484 = vpop.f32.mrb[0].mxu0
    %v485 = vadd.f32 %v390, %v484
    %v486 = vpop.f32.mrb[0].mxu0
    %487 = vmatprep.mubr.bf16.mxu0 0
    %488 = vmatmul.mubr.bf16.gmra.mrb[0].mxu0 %v412
    %v489 = vpop.f32.mrb[0].mxu0
    %v490 = vadd.f32 %v390, %v489
    %v491 = vpop.f32.mrb[0].mxu0
    %v492 = vpop.f32.mrb[0].mxu0
    %v493 = vadd.f32 %v390, %v492
    %v494 = vpop.f32.mrb[0].mxu0
    %495 = vmatprep.mubr.bf16.mxu0 0
    %496 = vmatmul.mubr.bf16.gmra.mrb[0].mxu0 %v415
    %v497 = vpop.f32.mrb[0].mxu0
    %v498 = vadd.f32 %v390, %v497
    %v499 = vpop.f32.mrb[0].mxu0
    %v500 = vpop.f32.mrb[0].mxu0
    %v501 = vadd.f32 %v390, %v500
    %v502 = vpop.f32.mrb[0].mxu0
    %503 = vmatprep.mubr.bf16.mxu0 0
    %504 = vmatmul.mubr.bf16.gmra.mrb[0].mxu0 %v418
    %v505 = vpop.f32.mrb[0].mxu0
    %v506 = vadd.f32 %v390, %v505
    %v507 = vpop.f32.mrb[0].mxu0
    %v508 = vpop.f32.mrb[0].mxu0
    %v509 = vadd.f32 %v390, %v508
    %v510 = vpop.f32.mrb[0].mxu0
    %511 = vmatprep.mubr.bf16.mxu0 0
    %512 = vmatmul.mubr.bf16.gmra.mrb[0].mxu0 %v421
    %v513 = vpop.f32.mrb[0].mxu0
    %v514 = vadd.f32 %v390, %v513
    %v515 = vpop.f32.mrb[0].mxu0
    %v516 = vpop.f32.mrb[0].mxu0
    %v517 = vadd.f32 %v390, %v516
    %v518 = vpop.f32.mrb[0].mxu0
    %519 = vdwg.mxu0
    %v520 = vmax.f32 %v458, 0.0
    %v521 = vmax.f32 %v461, 0.0
    %v522 = vmax.f32 %v466, 0.0
    %v523 = vmax.f32 %v469, 0.0
    %v524 = vmax.f32 %v474, 0.0
    %v525 = vmax.f32 %v477, 0.0
    %v526 = vmax.f32 %v482, 0.0
    %v527 = vmax.f32 %v485, 0.0
    %v528 = vmax.f32 %v490, 0.0
    %v529 = vmax.f32 %v493, 0.0
    %v530 = vmax.f32 %v498, 0.0
    %v531 = vmax.f32 %v501, 0.0
    %v532 = vmax.f32 %v506, 0.0
    %v533 = vmax.f32 %v509, 0.0
    %v534 = vmax.f32 %v514, 0.0
    %v535 = vmax.f32 %v517, 0.0
    %v536 = vpack.c.bf16 %v521, %v520
    %v537 = vpack.c.bf16 %v523, %v522
    %v538 = vpack.c.bf16 %v525, %v524
    %v539 = vpack.c.bf16 %v527, %v526
    %v540 = vpack.c.bf16 %v529, %v528
    %v541 = vpack.c.bf16 %v531, %v530
    %v542 = vpack.c.bf16 %v533, %v532
    %v543 = vpack.c.bf16 %v535, %v534
    %v544 = vld [vmem:[#allocation6] sm:$0xf]
    %v545 = vld [vmem:[#allocation6 + $0x4] sm:$0xf]
    %v546 = vld [vmem:[#allocation6 + $0x8] sm:$0xf]
    %v547 = vld [vmem:[#allocation6 + $0xc] sm:$0xf]
    %v548 = vld [vmem:[#allocation6 + $0x10] sm:$0xf]
    %v549 = vld [vmem:[#allocation6 + $0x14] sm:$0xf]
    %v550 = vld [vmem:[#allocation6 + $0x18] sm:$0xf]
    %v551 = vld [vmem:[#allocation6 + $0x1c] sm:$0xf]
    %v552 = vld [vmem:[#allocation6 + $0x20] sm:$0xf]
    %v553 = vld [vmem:[#allocation6 + $0x24] sm:$0xf]
    %v554 = vld [vmem:[#allocation6 + $0x28] sm:$0xf]
    %v555 = vld [vmem:[#allocation6 + $0x2c] sm:$0xf]
    %v556 = vld [vmem:[#allocation6 + $0x30] sm:$0xf]
    %v557 = vld [vmem:[#allocation6 + $0x34] sm:$0xf]
    %v558 = vld [vmem:[#allocation6 + $0x38] sm:$0xf]
    %v559 = vld [vmem:[#allocation6 + $0x3c] sm:$0xf]
    %v560 = vld [vmem:[%s8] sm:$0x1]
    %v562 = vlaneseq
    %v563 = vshrl.u32 %v562, 7
    %v564 = vsub.s32 0, %v563
    %v565 = vrot.slane %v560, %v564
    %v583 = vunpack.c.l.b16 %v544
    %v584 = vunpack.c.l.b16 %v545
    %v585 = vunpack.c.l.b16 %v546
    %v586 = vunpack.c.l.b16 %v547
    %v587 = vunpack.c.l.b16 %v548
    %v588 = vunpack.c.l.b16 %v549
    %v589 = vunpack.c.l.b16 %v550
    %v590 = vunpack.c.l.b16 %v551
    %v591 = vunpack.c.l.b16 %v552
    %v592 = vunpack.c.l.b16 %v553
    %v593 = vunpack.c.l.b16 %v554
    %v594 = vunpack.c.l.b16 %v555
    %v595 = vunpack.c.l.b16 %v556
    %v596 = vunpack.c.l.b16 %v557
    %v597 = vunpack.c.l.b16 %v558
    %v598 = vunpack.c.l.b16 %v559
    %v599 = vpack.c.b16 %v584, %v583
    %v600 = vpack.c.b16 %v586, %v585
    %v601 = vpack.c.b16 %v588, %v587
    %v602 = vpack.c.b16 %v590, %v589
    %v603 = vpack.c.b16 %v592, %v591
    %v604 = vpack.c.b16 %v594, %v593
    %v605 = vpack.c.b16 %v596, %v595
    %v606 = vpack.c.b16 %v598, %v597
    %615 = vmatprep.subr.bf16.mxu0 0
    %616 = vmatpush1.bf16.msra.mxu0 %v599
    %617 = vmatprep.subr.bf16.mxu0 0
    %618 = vmatpush1.bf16.msra.mxu0 %v600
    %619 = vmatprep.subr.bf16.mxu0 0
    %620 = vmatpush1.bf16.msra.mxu0 %v601
    %621 = vmatprep.subr.bf16.mxu0 0
    %622 = vmatpush1.bf16.msra.mxu0 %v602
    %623 = vmatprep.subr.bf16.mxu0 0
    %624 = vmatpush1.bf16.msra.mxu0 %v603
    %625 = vmatprep.subr.bf16.mxu0 0
    %626 = vmatpush1.bf16.msra.mxu0 %v604
    %627 = vmatprep.subr.bf16.mxu0 0
    %628 = vmatpush1.bf16.msra.mxu0 %v605
    %629 = vmatprep.subr.bf16.mxu0 0
    %630 = vmatpush1.bf16.msra.mxu0 %v606
    %631 = vmatprep.subr.bf16.mxu0 0
    %632 = vmatpush1.bf16.msra.mxu0 0
    %633 = vmatprep.subr.bf16.mxu0 0
    %634 = vmatpush1.bf16.msra.mxu0 0
    %635 = vmatprep.subr.bf16.mxu0 0
    %636 = vmatpush1.bf16.msra.mxu0 0
    %637 = vmatprep.subr.bf16.mxu0 0
    %638 = vmatpush1.bf16.msra.mxu0 0
    %639 = vmatprep.subr.bf16.mxu0 0
    %640 = vmatpush1.bf16.msra.mxu0 0
    %641 = vmatprep.subr.bf16.mxu0 0
    %642 = vmatpush1.bf16.msra.mxu0 0
    %643 = vmatprep.subr.bf16.mxu0 0
    %644 = vmatpush1.bf16.msra.mxu0 0
    %645 = vmatprep.subr.bf16.mxu0 0
    %646 = vmatpush1.bf16.msra.mxu0 0
    %647 = vmatprep.mubr.bf16.mxu0 0
    %648 = vmatmul.mubr.bf16.gmra.mrb[0].mxu0 %v536
    %v649 = vpop.f32.mrb[0].mxu0
    %v650 = vadd.f32 %v565, %v649
    %v651 = vpop.f32.mrb[0].mxu0
    %v652 = vpop.f32.mrb[0].mxu0
    %v653 = vadd.f32 %v565, %v652
    %v654 = vpop.f32.mrb[0].mxu0
    %655 = vmatprep.mubr.bf16.mxu0 0
    %656 = vmatmul.mubr.bf16.gmra.mrb[0].mxu0 %v537
    %v657 = vpop.f32.mrb[0].mxu0
    %v658 = vadd.f32 %v565, %v657
    %v659 = vpop.f32.mrb[0].mxu0
    %v660 = vpop.f32.mrb[0].mxu0
    %v661 = vadd.f32 %v565, %v660
    %v662 = vpop.f32.mrb[0].mxu0
    %663 = vmatprep.mubr.bf16.mxu0 0
    %664 = vmatmul.mubr.bf16.gmra.mrb[0].mxu0 %v538
    %v665 = vpop.f32.mrb[0].mxu0
    %v666 = vadd.f32 %v565, %v665
    %v667 = vpop.f32.mrb[0].mxu0
    %v668 = vpop.f32.mrb[0].mxu0
    %v669 = vadd.f32 %v565, %v668
    %v670 = vpop.f32.mrb[0].mxu0
    %671 = vmatprep.mubr.bf16.mxu0 0
    %672 = vmatmul.mubr.bf16.gmra.mrb[0].mxu0 %v539
    %v673 = vpop.f32.mrb[0].mxu0
    %v674 = vadd.f32 %v565, %v673
    %v675 = vpop.f32.mrb[0].mxu0
    %v676 = vpop.f32.mrb[0].mxu0
    %v677 = vadd.f32 %v565, %v676
    %v678 = vpop.f32.mrb[0].mxu0
    %679 = vmatprep.mubr.bf16.mxu0 0
    %680 = vmatmul.mubr.bf16.gmra.mrb[0].mxu0 %v540
    %v681 = vpop.f32.mrb[0].mxu0
    %v682 = vadd.f32 %v565, %v681
    %v683 = vpop.f32.mrb[0].mxu0
    %v684 = vpop.f32.mrb[0].mxu0
    %v685 = vadd.f32 %v565, %v684
    %v686 = vpop.f32.mrb[0].mxu0
    %687 = vmatprep.mubr.bf16.mxu0 0
    %688 = vmatmul.mubr.bf16.gmra.mrb[0].mxu0 %v541
    %v689 = vpop.f32.mrb[0].mxu0
    %v690 = vadd.f32 %v565, %v689
    %v691 = vpop.f32.mrb[0].mxu0
    %v692 = vpop.f32.mrb[0].mxu0
    %v693 = vadd.f32 %v565, %v692
    %v694 = vpop.f32.mrb[0].mxu0
    %695 = vmatprep.mubr.bf16.mxu0 0
    %696 = vmatmul.mubr.bf16.gmra.mrb[0].mxu0 %v542
    %v697 = vpop.f32.mrb[0].mxu0
    %v698 = vadd.f32 %v565, %v697
    %v699 = vpop.f32.mrb[0].mxu0
    %v700 = vpop.f32.mrb[0].mxu0
    %v701 = vadd.f32 %v565, %v700
    %v702 = vpop.f32.mrb[0].mxu0
    %703 = vmatprep.mubr.bf16.mxu0 0
    %704 = vmatmul.mubr.bf16.gmra.mrb[0].mxu0 %v543
    %v705 = vpop.f32.mrb[0].mxu0
    %v706 = vadd.f32 %v565, %v705
    %v707 = vpop.f32.mrb[0].mxu0
    %v708 = vpop.f32.mrb[0].mxu0
    %v709 = vadd.f32 %v565, %v708
    %v710 = vpop.f32.mrb[0].mxu0
    %711 = vdwg.mxu0
    %v712 = vmax.f32 %v650, 0.0
    %v713 = vmax.f32 %v653, 0.0
    %v714 = vmax.f32 %v658, 0.0
    %v715 = vmax.f32 %v661, 0.0
    %v716 = vmax.f32 %v666, 0.0
    %v717 = vmax.f32 %v669, 0.0
    %v718 = vmax.f32 %v674, 0.0
    %v719 = vmax.f32 %v677, 0.0
    %v720 = vmax.f32 %v682, 0.0
    %v721 = vmax.f32 %v685, 0.0
    %v722 = vmax.f32 %v690, 0.0
    %v723 = vmax.f32 %v693, 0.0
    %v724 = vmax.f32 %v698, 0.0
    %v725 = vmax.f32 %v701, 0.0
    %v726 = vmax.f32 %v706, 0.0
    %v727 = vmax.f32 %v709, 0.0
    %v728 = vld [vmem:[%s9] sm:$0x1]
    %v730 = vlaneseq
    %v731 = vshrl.u32 %v730, 7
    %v732 = vsub.s32 0, %v731
    %v733 = vrot.slane %v728, %v732
    %v735 = vmul.f32 %v712, %v733
    %v736 = vmul.f32 %v713, %v733
    %v737 = vmul.f32 %v714, %v733
    %v738 = vmul.f32 %v715, %v733
    %v739 = vmul.f32 %v716, %v733
    %v740 = vmul.f32 %v717, %v733
    %v741 = vmul.f32 %v718, %v733
    %v742 = vmul.f32 %v719, %v733
    %v743 = vmul.f32 %v720, %v733
    %v744 = vmul.f32 %v721, %v733
    %v745 = vmul.f32 %v722, %v733
    %v746 = vmul.f32 %v723, %v733
    %v747 = vmul.f32 %v724, %v733
    %v748 = vmul.f32 %v725, %v733
    %v749 = vmul.f32 %v726, %v733
    %v750 = vmul.f32 %v727, %v733
    %v751 = vld [vmem:[%s10] sm:$0x1]
    %v753 = vlaneseq
    %v754 = vshrl.u32 %v753, 7
    %v755 = vsub.s32 0, %v754
    %v756 = vrot.slane %v751, %v755
    %v758 = vadd.f32 %v735, %v756
    %v759 = vadd.f32 %v736, %v756
    %v760 = vadd.f32 %v737, %v756
    %v761 = vadd.f32 %v738, %v756
    %v762 = vadd.f32 %v739, %v756
    %v763 = vadd.f32 %v740, %v756
    %v764 = vadd.f32 %v741, %v756
    %v765 = vadd.f32 %v742, %v756
    %v766 = vadd.f32 %v743, %v756
    %v767 = vadd.f32 %v744, %v756
    %v768 = vadd.f32 %v745, %v756
    %v769 = vadd.f32 %v746, %v756
    %v770 = vadd.f32 %v747, %v756
    %v771 = vadd.f32 %v748, %v756
    %v772 = vadd.f32 %v749, %v756
    %v773 = vadd.f32 %v750, %v756
    %v774 = vpack.c.bf16 %v759, %v758
    %v775 = vpack.c.bf16 %v761, %v760
    %v776 = vpack.c.bf16 %v763, %v762
    %v777 = vpack.c.bf16 %v765, %v764
    %v778 = vpack.c.bf16 %v767, %v766
    %v779 = vpack.c.bf16 %v769, %v768
    %v780 = vpack.c.bf16 %v771, %v770
    %v781 = vpack.c.bf16 %v773, %v772
    %782 = vmatprep.subr.bf16.mxu0 0
    %783 = vmatpush1.bf16.msra.mxu0 %v774
    %784 = vmatprep.subr.bf16.mxu0 0
    %785 = vmatpush1.bf16.msra.mxu0 %v775
    %786 = vmatprep.subr.bf16.mxu0 0
    %787 = vmatpush1.bf16.msra.mxu0 %v776
    %788 = vmatprep.subr.bf16.mxu0 0
    %789 = vmatpush1.bf16.msra.mxu0 %v777
    %790 = vmatprep.subr.bf16.mxu0 0
    %791 = vmatpush1.bf16.msra.mxu0 %v778
    %792 = vmatprep.subr.bf16.mxu0 0
    %793 = vmatpush1.bf16.msra.mxu0 %v779
    %794 = vmatprep.subr.bf16.mxu0 0
    %795 = vmatpush1.bf16.msra.mxu0 %v780
    %796 = vmatprep.subr.bf16.mxu0 0
    %797 = vmatpush1.bf16.msra.mxu0 %v781
    %798 = vmatprep.subr.bf16.mxu0 0
    %799 = vmatpush1.bf16.msra.mxu0 0
    %800 = vmatprep.subr.bf16.mxu0 0
    %801 = vmatpush1.bf16.msra.mxu0 0
    %802 = vmatprep.subr.bf16.mxu0 0
    %803 = vmatpush1.bf16.msra.mxu0 0
    %804 = vmatprep.subr.bf16.mxu0 0
    %805 = vmatpush1.bf16.msra.mxu0 0
    %806 = vmatprep.subr.bf16.mxu0 0
    %807 = vmatpush1.bf16.msra.mxu0 0
    %808 = vmatprep.subr.bf16.mxu0 0
    %809 = vmatpush1.bf16.msra.mxu0 0
    %810 = vmatprep.subr.bf16.mxu0 0
    %811 = vmatpush1.bf16.msra.mxu0 0
    %812 = vmatprep.subr.bf16.mxu0 0
    %813 = vmatpush1.bf16.msra.mxu0 0
    %814 = vmatprep.mubr.bf16.mxu0 0
    %815 = vmatmul.mubr.bf16.gmra.mrb[0].mxu0 %v185
    %v816 = vpop.f32.mrb[0].mxu0
    %v817 = vadd.f32 0.0, %v816
    %v818 = vpop.f32.mrb[0].mxu0
    %v819 = vpop.f32.mrb[0].mxu0
    %v820 = vpop.f32.mrb[0].mxu0
    %821 = vdwg.mxu0
    %823 = vset.pattern.permute.xlu0 0
    %824 = vperm.xlu0 %823, %v186
    %v825 = vpop.permute.xlu0 %824
    %v827 = vmul.f32 %v817, %v825
    %v828 = vpack.c.bf16 %v827, %v827
    %v829 = vld [vmem:[%s23] sm:$0xf]
    %v830 = vld [vmem:[%s23 + $0x4] sm:$0xf]
    %v831 = vld [vmem:[%s23 + $0x8] sm:$0xf]
    %v832 = vld [vmem:[%s23 + $0xc] sm:$0xf]
    %v833 = vld [vmem:[%s23 + $0x10] sm:$0xf]
    %v834 = vld [vmem:[%s23 + $0x14] sm:$0xf]
    %v835 = vld [vmem:[%s23 + $0x18] sm:$0xf]
    %v836 = vld [vmem:[%s23 + $0x1c] sm:$0xf]
    %v837 = vld [vmem:[%s23 + $0x20] sm:$0xf]
    %v838 = vld [vmem:[%s23 + $0x24] sm:$0xf]
    %v839 = vld [vmem:[%s23 + $0x28] sm:$0xf]
    %v840 = vld [vmem:[%s23 + $0x2c] sm:$0xf]
    %v841 = vld [vmem:[%s23 + $0x30] sm:$0xf]
    %v842 = vld [vmem:[%s23 + $0x34] sm:$0xf]
    %v843 = vld [vmem:[%s23 + $0x38] sm:$0xf]
    %v844 = vld [vmem:[%s23 + $0x3c] sm:$0xf]
    %s845 = sld [smem:[#allocation2 + $0x1]]
    %s846 = sadd.f32 %s845, 1.0
    %v847 = vstv %s846
    %v848 = vmul.f32 %v847, %v758
    %v849 = vmul.f32 %v847, %v759
    %v850 = vmul.f32 %v847, %v760
    %v851 = vmul.f32 %v847, %v761
    %v852 = vmul.f32 %v847, %v762
    %v853 = vmul.f32 %v847, %v763
    %v854 = vmul.f32 %v847, %v764
    %v855 = vmul.f32 %v847, %v765
    %v856 = vmul.f32 %v847, %v766
    %v857 = vmul.f32 %v847, %v767
    %v858 = vmul.f32 %v847, %v768
    %v859 = vmul.f32 %v847, %v769
    %v860 = vmul.f32 %v847, %v770
    %v861 = vmul.f32 %v847, %v771
    %v862 = vmul.f32 %v847, %v772
    %v863 = vmul.f32 %v847, %v773
    %864 = vmatprep.subr.bf16.mxu0 0
    %865 = vmatpush1.bf16.msra.mxu0 %v774
    %866 = vmatprep.subr.bf16.mxu0 0
    %867 = vmatpush1.bf16.msra.mxu0 %v775
    %868 = vmatprep.subr.bf16.mxu0 0
    %869 = vmatpush1.bf16.msra.mxu0 %v776
    %870 = vmatprep.subr.bf16.mxu0 0
    %871 = vmatpush1.bf16.msra.mxu0 %v777
    %872 = vmatprep.subr.bf16.mxu0 0
    %873 = vmatpush1.bf16.msra.mxu0 %v778
    %874 = vmatprep.subr.bf16.mxu0 0
    %875 = vmatpush1.bf16.msra.mxu0 %v779
    %876 = vmatprep.subr.bf16.mxu0 0
    %877 = vmatpush1.bf16.msra.mxu0 %v780
    %878 = vmatprep.subr.bf16.mxu0 0
    %879 = vmatpush1.bf16.msra.mxu0 %v781
    %880 = vmatprep.subr.bf16.mxu0 0
    %881 = vmatpush1.bf16.msra.mxu0 0
    %882 = vmatprep.subr.bf16.mxu0 0
    %883 = vmatpush1.bf16.msra.mxu0 0
    %884 = vmatprep.subr.bf16.mxu0 0
    %885 = vmatpush1.bf16.msra.mxu0 0
    %886 = vmatprep.subr.bf16.mxu0 0
    %887 = vmatpush1.bf16.msra.mxu0 0
    %888 = vmatprep.subr.bf16.mxu0 0
    %889 = vmatpush1.bf16.msra.mxu0 0
    %890 = vmatprep.subr.bf16.mxu0 0
    %891 = vmatpush1.bf16.msra.mxu0 0
    %892 = vmatprep.subr.bf16.mxu0 0
    %893 = vmatpush1.bf16.msra.mxu0 0
    %894 = vmatprep.subr.bf16.mxu0 0
    %895 = vmatpush1.bf16.msra.mxu0 0
    %896 = vmatprep.mubr.bf16.mxu0 0
    %897 = vmatmul.mubr.bf16.gmra.mrb[0].mxu0 %v262
    %v898 = vpop.f32.mrb[0].mxu0
    %v899 = vadd.f32 %v848, %v898
    %v900 = vpop.f32.mrb[0].mxu0
    %v901 = vpop.f32.mrb[0].mxu0
    %v902 = vadd.f32 %v849, %v901
    %v903 = vpop.f32.mrb[0].mxu0
    %904 = vmatprep.mubr.bf16.mxu0 0
    %905 = vmatmul.mubr.bf16.gmra.mrb[0].mxu0 %v263
    %v906 = vpop.f32.mrb[0].mxu0
    %v907 = vadd.f32 %v850, %v906
    %v908 = vpop.f32.mrb[0].mxu0
    %v909 = vpop.f32.mrb[0].mxu0
    %v910 = vadd.f32 %v851, %v909
    %v911 = vpop.f32.mrb[0].mxu0
    %912 = vmatprep.mubr.bf16.mxu0 0
    %913 = vmatmul.mubr.bf16.gmra.mrb[0].mxu0 %v264
    %v914 = vpop.f32.mrb[0].mxu0
    %v915 = vadd.f32 %v852, %v914
    %v916 = vpop.f32.mrb[0].mxu0
    %v917 = vpop.f32.mrb[0].mxu0
    %v918 = vadd.f32 %v853, %v917
    %v919 = vpop.f32.mrb[0].mxu0
    %920 = vmatprep.mubr.bf16.mxu0 0
    %921 = vmatmul.mubr.bf16.gmra.mrb[0].mxu0 %v265
    %v922 = vpop.f32.mrb[0].mxu0
    %v923 = vadd.f32 %v854, %v922
    %v924 = vpop.f32.mrb[0].mxu0
    %v925 = vpop.f32.mrb[0].mxu0
    %v926 = vadd.f32 %v855, %v925
    %v927 = vpop.f32.mrb[0].mxu0
    %928 = vmatprep.mubr.bf16.mxu0 0
    %929 = vmatmul.mubr.bf16.gmra.mrb[0].mxu0 %v266
    %v930 = vpop.f32.mrb[0].mxu0
    %v931 = vadd.f32 %v856, %v930
    %v932 = vpop.f32.mrb[0].mxu0
    %v933 = vpop.f32.mrb[0].mxu0
    %v934 = vadd.f32 %v857, %v933
    %v935 = vpop.f32.mrb[0].mxu0
    %936 = vmatprep.mubr.bf16.mxu0 0
    %937 = vmatmul.mubr.bf16.gmra.mrb[0].mxu0 %v267
    %v938 = vpop.f32.mrb[0].mxu0
    %v939 = vadd.f32 %v858, %v938
    %v940 = vpop.f32.mrb[0].mxu0
    %v941 = vpop.f32.mrb[0].mxu0
    %v942 = vadd.f32 %v859, %v941
    %v943 = vpop.f32.mrb[0].mxu0
    %944 = vmatprep.mubr.bf16.mxu0 0
    %945 = vmatmul.mubr.bf16.gmra.mrb[0].mxu0 %v268
    %v946 = vpop.f32.mrb[0].mxu0
    %v947 = vadd.f32 %v860, %v946
    %v948 = vpop.f32.mrb[0].mxu0
    %v949 = vpop.f32.mrb[0].mxu0
    %v950 = vadd.f32 %v861, %v949
    %v951 = vpop.f32.mrb[0].mxu0
    %952 = vmatprep.mubr.bf16.mxu0 0
    %953 = vmatmul.mubr.bf16.gmra.mrb[0].mxu0 %v269
    %v954 = vpop.f32.mrb[0].mxu0
    %v955 = vadd.f32 %v862, %v954
    %v956 = vpop.f32.mrb[0].mxu0
    %v957 = vpop.f32.mrb[0].mxu0
    %v958 = vadd.f32 %v863, %v957
    %v959 = vpop.f32.mrb[0].mxu0
    %960 = vdwg.mxu0
    %v961 = vpack.c.bf16 %v902, %v899
    %v962 = vpack.c.bf16 %v910, %v907
    %v963 = vpack.c.bf16 %v918, %v915
    %v964 = vpack.c.bf16 %v926, %v923
    %v965 = vpack.c.bf16 %v934, %v931
    %v966 = vpack.c.bf16 %v942, %v939
    %v967 = vpack.c.bf16 %v950, %v947
    %v968 = vpack.c.bf16 %v958, %v955
    %v969 = vld [vmem:[#allocation7] sm:$0xf]
    %v970 = vld [vmem:[#allocation7 + $0x4] sm:$0xf]
    %v971 = vld [vmem:[#allocation7 + $0x8] sm:$0xf]
    %v972 = vld [vmem:[#allocation7 + $0xc] sm:$0xf]
    %v973 = vld [vmem:[#allocation7 + $0x10] sm:$0xf]
    %v974 = vld [vmem:[#allocation7 + $0x14] sm:$0xf]
    %v975 = vld [vmem:[#allocation7 + $0x18] sm:$0xf]
    %v976 = vld [vmem:[#allocation7 + $0x1c] sm:$0xf]
    %v977 = vld [vmem:[#allocation7 + $0x20] sm:$0xf]
    %v978 = vld [vmem:[#allocation7 + $0x24] sm:$0xf]
    %v979 = vld [vmem:[#allocation7 + $0x28] sm:$0xf]
    %v980 = vld [vmem:[#allocation7 + $0x2c] sm:$0xf]
    %v981 = vld [vmem:[#allocation7 + $0x30] sm:$0xf]
    %v982 = vld [vmem:[#allocation7 + $0x34] sm:$0xf]
    %v983 = vld [vmem:[#allocation7 + $0x38] sm:$0xf]
    %v984 = vld [vmem:[#allocation7 + $0x3c] sm:$0xf]
    %v985 = vld [vmem:[%s12] sm:$0x1]
    %v987 = vlaneseq
    %v988 = vshrl.u32 %v987, 7
    %v989 = vsub.s32 0, %v988
    %v990 = vrot.slane %v985, %v989
    %v1008 = vunpack.c.l.b16 %v969
    %v1009 = vunpack.c.l.b16 %v970
    %v1010 = vunpack.c.l.b16 %v971
    %v1011 = vunpack.c.l.b16 %v972
    %v1012 = vunpack.c.l.b16 %v973
    %v1013 = vunpack.c.l.b16 %v974
    %v1014 = vunpack.c.l.b16 %v975
    %v1015 = vunpack.c.l.b16 %v976
    %v1016 = vunpack.c.l.b16 %v977
    %v1017 = vunpack.c.l.b16 %v978
    %v1018 = vunpack.c.l.b16 %v979
    %v1019 = vunpack.c.l.b16 %v980
    %v1020 = vunpack.c.l.b16 %v981
    %v1021 = vunpack.c.l.b16 %v982
    %v1022 = vunpack.c.l.b16 %v983
    %v1023 = vunpack.c.l.b16 %v984
    %v1024 = vpack.c.b16 %v1009, %v1008
    %v1025 = vpack.c.b16 %v1011, %v1010
    %v1026 = vpack.c.b16 %v1013, %v1012
    %v1027 = vpack.c.b16 %v1015, %v1014
    %v1028 = vpack.c.b16 %v1017, %v1016
    %v1029 = vpack.c.b16 %v1019, %v1018
    %v1030 = vpack.c.b16 %v1021, %v1020
    %v1031 = vpack.c.b16 %v1023, %v1022
    %1040 = vmatprep.subr.bf16.mxu0 0
    %1041 = vmatpush1.bf16.msra.mxu0 %v1024
    %1042 = vmatprep.subr.bf16.mxu0 0
    %1043 = vmatpush1.bf16.msra.mxu0 %v1025
    %1044 = vmatprep.subr.bf16.mxu0 0
    %1045 = vmatpush1.bf16.msra.mxu0 %v1026
    %1046 = vmatprep.subr.bf16.mxu0 0
    %1047 = vmatpush1.bf16.msra.mxu0 %v1027
    %1048 = vmatprep.subr.bf16.mxu0 0
    %1049 = vmatpush1.bf16.msra.mxu0 %v1028
    %1050 = vmatprep.subr.bf16.mxu0 0
    %1051 = vmatpush1.bf16.msra.mxu0 %v1029
    %1052 = vmatprep.subr.bf16.mxu0 0
    %1053 = vmatpush1.bf16.msra.mxu0 %v1030
    %1054 = vmatprep.subr.bf16.mxu0 0
    %1055 = vmatpush1.bf16.msra.mxu0 %v1031
    %1056 = vmatprep.subr.bf16.mxu0 0
    %1057 = vmatpush1.bf16.msra.mxu0 0
    %1058 = vmatprep.subr.bf16.mxu0 0
    %1059 = vmatpush1.bf16.msra.mxu0 0
    %1060 = vmatprep.subr.bf16.mxu0 0
    %1061 = vmatpush1.bf16.msra.mxu0 0
    %1062 = vmatprep.subr.bf16.mxu0 0
    %1063 = vmatpush1.bf16.msra.mxu0 0
    %1064 = vmatprep.subr.bf16.mxu0 0
    %1065 = vmatpush1.bf16.msra.mxu0 0
    %1066 = vmatprep.subr.bf16.mxu0 0
    %1067 = vmatpush1.bf16.msra.mxu0 0
    %1068 = vmatprep.subr.bf16.mxu0 0
    %1069 = vmatpush1.bf16.msra.mxu0 0
    %1070 = vmatprep.subr.bf16.mxu0 0
    %1071 = vmatpush1.bf16.msra.mxu0 0
    %1072 = vmatprep.mubr.bf16.mxu0 0
    %1073 = vmatmul.mubr.bf16.gmra.mrb[0].mxu0 %v961
    %v1074 = vpop.f32.mrb[0].mxu0
    %v1075 = vadd.f32 %v990, %v1074
    %v1076 = vpop.f32.mrb[0].mxu0
    %v1077 = vpop.f32.mrb[0].mxu0
    %v1078 = vadd.f32 %v990, %v1077
    %v1079 = vpop.f32.mrb[0].mxu0
    %1080 = vmatprep.mubr.bf16.mxu0 0
    %1081 = vmatmul.mubr.bf16.gmra.mrb[0].mxu0 %v962
    %v1082 = vpop.f32.mrb[0].mxu0
    %v1083 = vadd.f32 %v990, %v1082
    %v1084 = vpop.f32.mrb[0].mxu0
    %v1085 = vpop.f32.mrb[0].mxu0
    %v1086 = vadd.f32 %v990, %v1085
    %v1087 = vpop.f32.mrb[0].mxu0
    %1088 = vmatprep.mubr.bf16.mxu0 0
    %1089 = vmatmul.mubr.bf16.gmra.mrb[0].mxu0 %v963
    %v1090 = vpop.f32.mrb[0].mxu0
    %v1091 = vadd.f32 %v990, %v1090
    %v1092 = vpop.f32.mrb[0].mxu0
    %v1093 = vpop.f32.mrb[0].mxu0
    %v1094 = vadd.f32 %v990, %v1093
    %v1095 = vpop.f32.mrb[0].mxu0
    %1096 = vmatprep.mubr.bf16.mxu0 0
    %1097 = vmatmul.mubr.bf16.gmra.mrb[0].mxu0 %v964
    %v1098 = vpop.f32.mrb[0].mxu0
    %v1099 = vadd.f32 %v990, %v1098
    %v1100 = vpop.f32.mrb[0].mxu0
    %v1101 = vpop.f32.mrb[0].mxu0
    %v1102 = vadd.f32 %v990, %v1101
    %v1103 = vpop.f32.mrb[0].mxu0
    %1104 = vmatprep.mubr.bf16.mxu0 0
    %1105 = vmatmul.mubr.bf16.gmra.mrb[0].mxu0 %v965
    %v1106 = vpop.f32.mrb[0].mxu0
    %v1107 = vadd.f32 %v990, %v1106
    %v1108 = vpop.f32.mrb[0].mxu0
    %v1109 = vpop.f32.mrb[0].mxu0
    %v1110 = vadd.f32 %v990, %v1109
    %v1111 = vpop.f32.mrb[0].mxu0
    %1112 = vmatprep.mubr.bf16.mxu0 0
    %1113 = vmatmul.mubr.bf16.gmra.mrb[0].mxu0 %v966
    %v1114 = vpop.f32.mrb[0].mxu0
    %v1115 = vadd.f32 %v990, %v1114
    %v1116 = vpop.f32.mrb[0].mxu0
    %v1117 = vpop.f32.mrb[0].mxu0
    %v1118 = vadd.f32 %v990, %v1117
    %v1119 = vpop.f32.mrb[0].mxu0
    %1120 = vmatprep.mubr.bf16.mxu0 0
    %1121 = vmatmul.mubr.bf16.gmra.mrb[0].mxu0 %v967
    %v1122 = vpop.f32.mrb[0].mxu0
    %v1123 = vadd.f32 %v990, %v1122
    %v1124 = vpop.f32.mrb[0].mxu0
    %v1125 = vpop.f32.mrb[0].mxu0
    %v1126 = vadd.f32 %v990, %v1125
    %v1127 = vpop.f32.mrb[0].mxu0
    %1128 = vmatprep.mubr.bf16.mxu0 0
    %1129 = vmatmul.mubr.bf16.gmra.mrb[0].mxu0 %v968
    %v1130 = vpop.f32.mrb[0].mxu0
    %v1131 = vadd.f32 %v990, %v1130
    %v1132 = vpop.f32.mrb[0].mxu0
    %v1133 = vpop.f32.mrb[0].mxu0
    %v1134 = vadd.f32 %v990, %v1133
    %v1135 = vpop.f32.mrb[0].mxu0
    %1136 = vdwg.mxu0
    %v1137 = vmax.f32 %v1075, 0.0
    %v1138 = vmax.f32 %v1078, 0.0
    %v1139 = vmax.f32 %v1083, 0.0
    %v1140 = vmax.f32 %v1086, 0.0
    %v1141 = vmax.f32 %v1091, 0.0
    %v1142 = vmax.f32 %v1094, 0.0
    %v1143 = vmax.f32 %v1099, 0.0
    %v1144 = vmax.f32 %v1102, 0.0
    %v1145 = vmax.f32 %v1107, 0.0
    %v1146 = vmax.f32 %v1110, 0.0
    %v1147 = vmax.f32 %v1115, 0.0
    %v1148 = vmax.f32 %v1118, 0.0
    %v1149 = vmax.f32 %v1123, 0.0
    %v1150 = vmax.f32 %v1126, 0.0
    %v1151 = vmax.f32 %v1131, 0.0
    %v1152 = vmax.f32 %v1134, 0.0
    %v1153 = vpack.c.bf16 %v1138, %v1137
    %v1154 = vpack.c.bf16 %v1140, %v1139
    %v1155 = vpack.c.bf16 %v1142, %v1141
    %v1156 = vpack.c.bf16 %v1144, %v1143
    %v1157 = vpack.c.bf16 %v1146, %v1145
    %v1158 = vpack.c.bf16 %v1148, %v1147
    %v1159 = vpack.c.bf16 %v1150, %v1149
    %v1160 = vpack.c.bf16 %v1152, %v1151
    %v1161 = vld [vmem:[#allocation9] sm:$0xf]
    %v1162 = vld [vmem:[#allocation9 + $0x4] sm:$0xf]
    %v1163 = vld [vmem:[#allocation9 + $0x8] sm:$0xf]
    %v1164 = vld [vmem:[#allocation9 + $0xc] sm:$0xf]
    %v1165 = vld [vmem:[#allocation9 + $0x10] sm:$0xf]
    %v1166 = vld [vmem:[#allocation9 + $0x14] sm:$0xf]
    %v1167 = vld [vmem:[#allocation9 + $0x18] sm:$0xf]
    %v1168 = vld [vmem:[#allocation9 + $0x1c] sm:$0xf]
    %v1169 = vld [vmem:[#allocation9 + $0x20] sm:$0xf]
    %v1170 = vld [vmem:[#allocation9 + $0x24] sm:$0xf]
    %v1171 = vld [vmem:[#allocation9 + $0x28] sm:$0xf]
    %v1172 = vld [vmem:[#allocation9 + $0x2c] sm:$0xf]
    %v1173 = vld [vmem:[#allocation9 + $0x30] sm:$0xf]
    %v1174 = vld [vmem:[#allocation9 + $0x34] sm:$0xf]
    %v1175 = vld [vmem:[#allocation9 + $0x38] sm:$0xf]
    %v1176 = vld [vmem:[#allocation9 + $0x3c] sm:$0xf]
    %v1177 = vld [vmem:[%s14] sm:$0x1]
    %v1179 = vlaneseq
    %v1180 = vshrl.u32 %v1179, 7
    %v1181 = vsub.s32 0, %v1180
    %v1182 = vrot.slane %v1177, %v1181
    %v1200 = vunpack.c.l.b16 %v1161
    %v1201 = vunpack.c.l.b16 %v1162
    %v1202 = vunpack.c.l.b16 %v1163
    %v1203 = vunpack.c.l.b16 %v1164
    %v1204 = vunpack.c.l.b16 %v1165
    %v1205 = vunpack.c.l.b16 %v1166
    %v1206 = vunpack.c.l.b16 %v1167
    %v1207 = vunpack.c.l.b16 %v1168
    %v1208 = vunpack.c.l.b16 %v1169
    %v1209 = vunpack.c.l.b16 %v1170
    %v1210 = vunpack.c.l.b16 %v1171
    %v1211 = vunpack.c.l.b16 %v1172
    %v1212 = vunpack.c.l.b16 %v1173
    %v1213 = vunpack.c.l.b16 %v1174
    %v1214 = vunpack.c.l.b16 %v1175
    %v1215 = vunpack.c.l.b16 %v1176
    %v1216 = vpack.c.b16 %v1201, %v1200
    %v1217 = vpack.c.b16 %v1203, %v1202
    %v1218 = vpack.c.b16 %v1205, %v1204
    %v1219 = vpack.c.b16 %v1207, %v1206
    %v1220 = vpack.c.b16 %v1209, %v1208
    %v1221 = vpack.c.b16 %v1211, %v1210
    %v1222 = vpack.c.b16 %v1213, %v1212
    %v1223 = vpack.c.b16 %v1215, %v1214
    %1232 = vmatprep.subr.bf16.mxu0 0
    %1233 = vmatpush1.bf16.msra.mxu0 %v1216
    %1234 = vmatprep.subr.bf16.mxu0 0
    %1235 = vmatpush1.bf16.msra.mxu0 %v1217
    %1236 = vmatprep.subr.bf16.mxu0 0
    %1237 = vmatpush1.bf16.msra.mxu0 %v1218
    %1238 = vmatprep.subr.bf16.mxu0 0
    %1239 = vmatpush1.bf16.msra.mxu0 %v1219
    %1240 = vmatprep.subr.bf16.mxu0 0
    %1241 = vmatpush1.bf16.msra.mxu0 %v1220
    %1242 = vmatprep.subr.bf16.mxu0 0
    %1243 = vmatpush1.bf16.msra.mxu0 %v1221
    %1244 = vmatprep.subr.bf16.mxu0 0
    %1245 = vmatpush1.bf16.msra.mxu0 %v1222
    %1246 = vmatprep.subr.bf16.mxu0 0
    %1247 = vmatpush1.bf16.msra.mxu0 %v1223
    %1248 = vmatprep.subr.bf16.mxu0 0
    %1249 = vmatpush1.bf16.msra.mxu0 0
    %1250 = vmatprep.subr.bf16.mxu0 0
    %1251 = vmatpush1.bf16.msra.mxu0 0
    %1252 = vmatprep.subr.bf16.mxu0 0
    %1253 = vmatpush1.bf16.msra.mxu0 0
    %1254 = vmatprep.subr.bf16.mxu0 0
    %1255 = vmatpush1.bf16.msra.mxu0 0
    %1256 = vmatprep.subr.bf16.mxu0 0
    %1257 = vmatpush1.bf16.msra.mxu0 0
    %1258 = vmatprep.subr.bf16.mxu0 0
    %1259 = vmatpush1.bf16.msra.mxu0 0
    %1260 = vmatprep.subr.bf16.mxu0 0
    %1261 = vmatpush1.bf16.msra.mxu0 0
    %1262 = vmatprep.subr.bf16.mxu0 0
    %1263 = vmatpush1.bf16.msra.mxu0 0
    %1264 = vmatprep.mubr.bf16.mxu0 0
    %1265 = vmatmul.mubr.bf16.gmra.mrb[0].mxu0 %v1153
    %v1266 = vpop.f32.mrb[0].mxu0
    %v1267 = vadd.f32 %v1182, %v1266
    %v1268 = vpop.f32.mrb[0].mxu0
    %v1269 = vpop.f32.mrb[0].mxu0
    %v1270 = vadd.f32 %v1182, %v1269
    %v1271 = vpop.f32.mrb[0].mxu0
    %1272 = vmatprep.mubr.bf16.mxu0 0
    %1273 = vmatmul.mubr.bf16.gmra.mrb[0].mxu0 %v1154
    %v1274 = vpop.f32.mrb[0].mxu0
    %v1275 = vadd.f32 %v1182, %v1274
    %v1276 = vpop.f32.mrb[0].mxu0
    %v1277 = vpop.f32.mrb[0].mxu0
    %v1278 = vadd.f32 %v1182, %v1277
    %v1279 = vpop.f32.mrb[0].mxu0
    %1280 = vmatprep.mubr.bf16.mxu0 0
    %1281 = vmatmul.mubr.bf16.gmra.mrb[0].mxu0 %v1155
    %v1282 = vpop.f32.mrb[0].mxu0
    %v1283 = vadd.f32 %v1182, %v1282
    %v1284 = vpop.f32.mrb[0].mxu0
    %v1285 = vpop.f32.mrb[0].mxu0
    %v1286 = vadd.f32 %v1182, %v1285
    %v1287 = vpop.f32.mrb[0].mxu0
    %1288 = vmatprep.mubr.bf16.mxu0 0
    %1289 = vmatmul.mubr.bf16.gmra.mrb[0].mxu0 %v1156
    %v1290 = vpop.f32.mrb[0].mxu0
    %v1291 = vadd.f32 %v1182, %v1290
    %v1292 = vpop.f32.mrb[0].mxu0
    %v1293 = vpop.f32.mrb[0].mxu0
    %v1294 = vadd.f32 %v1182, %v1293
    %v1295 = vpop.f32.mrb[0].mxu0
    %1296 = vmatprep.mubr.bf16.mxu0 0
    %1297 = vmatmul.mubr.bf16.gmra.mrb[0].mxu0 %v1157
    %v1298 = vpop.f32.mrb[0].mxu0
    %v1299 = vadd.f32 %v1182, %v1298
    %v1300 = vpop.f32.mrb[0].mxu0
    %v1301 = vpop.f32.mrb[0].mxu0
    %v1302 = vadd.f32 %v1182, %v1301
    %v1303 = vpop.f32.mrb[0].mxu0
    %1304 = vmatprep.mubr.bf16.mxu0 0
    %1305 = vmatmul.mubr.bf16.gmra.mrb[0].mxu0 %v1158
    %v1306 = vpop.f32.mrb[0].mxu0
    %v1307 = vadd.f32 %v1182, %v1306
    %v1308 = vpop.f32.mrb[0].mxu0
    %v1309 = vpop.f32.mrb[0].mxu0
    %v1310 = vadd.f32 %v1182, %v1309
    %v1311 = vpop.f32.mrb[0].mxu0
    %1312 = vmatprep.mubr.bf16.mxu0 0
    %1313 = vmatmul.mubr.bf16.gmra.mrb[0].mxu0 %v1159
    %v1314 = vpop.f32.mrb[0].mxu0
    %v1315 = vadd.f32 %v1182, %v1314
    %v1316 = vpop.f32.mrb[0].mxu0
    %v1317 = vpop.f32.mrb[0].mxu0
    %v1318 = vadd.f32 %v1182, %v1317
    %v1319 = vpop.f32.mrb[0].mxu0
    %1320 = vmatprep.mubr.bf16.mxu0 0
    %1321 = vmatmul.mubr.bf16.gmra.mrb[0].mxu0 %v1160
    %v1322 = vpop.f32.mrb[0].mxu0
    %v1323 = vadd.f32 %v1182, %v1322
    %v1324 = vpop.f32.mrb[0].mxu0
    %v1325 = vpop.f32.mrb[0].mxu0
    %v1326 = vadd.f32 %v1182, %v1325
    %v1327 = vpop.f32.mrb[0].mxu0
    %1328 = vdwg.mxu0
    %v1329 = vmax.f32 %v1267, 0.0
    %v1330 = vmax.f32 %v1270, 0.0
    %v1331 = vmax.f32 %v1275, 0.0
    %v1332 = vmax.f32 %v1278, 0.0
    %v1333 = vmax.f32 %v1283, 0.0
    %v1334 = vmax.f32 %v1286, 0.0
    %v1335 = vmax.f32 %v1291, 0.0
    %v1336 = vmax.f32 %v1294, 0.0
    %v1337 = vmax.f32 %v1299, 0.0
    %v1338 = vmax.f32 %v1302, 0.0
    %v1339 = vmax.f32 %v1307, 0.0
    %v1340 = vmax.f32 %v1310, 0.0
    %v1341 = vmax.f32 %v1315, 0.0
    %v1342 = vmax.f32 %v1318, 0.0
    %v1343 = vmax.f32 %v1323, 0.0
    %v1344 = vmax.f32 %v1326, 0.0
    %v1345 = vld [vmem:[%s15] sm:$0x1]
    %v1347 = vlaneseq
    %v1348 = vshrl.u32 %v1347, 7
    %v1349 = vsub.s32 0, %v1348
    %v1350 = vrot.slane %v1345, %v1349
    %v1352 = vmul.f32 %v1329, %v1350
    %v1353 = vmul.f32 %v1330, %v1350
    %v1354 = vmul.f32 %v1331, %v1350
    %v1355 = vmul.f32 %v1332, %v1350
    %v1356 = vmul.f32 %v1333, %v1350
    %v1357 = vmul.f32 %v1334, %v1350
    %v1358 = vmul.f32 %v1335, %v1350
    %v1359 = vmul.f32 %v1336, %v1350
    %v1360 = vmul.f32 %v1337, %v1350
    %v1361 = vmul.f32 %v1338, %v1350
    %v1362 = vmul.f32 %v1339, %v1350
    %v1363 = vmul.f32 %v1340, %v1350
    %v1364 = vmul.f32 %v1341, %v1350
    %v1365 = vmul.f32 %v1342, %v1350
    %v1366 = vmul.f32 %v1343, %v1350
    %v1367 = vmul.f32 %v1344, %v1350
    %v1368 = vld [vmem:[%s16] sm:$0x1]
    %v1370 = vlaneseq
    %v1371 = vshrl.u32 %v1370, 7
    %v1372 = vsub.s32 0, %v1371
    %v1373 = vrot.slane %v1368, %v1372
    %v1375 = vadd.f32 %v1352, %v1373
    %v1376 = vadd.f32 %v1353, %v1373
    %v1377 = vadd.f32 %v1354, %v1373
    %v1378 = vadd.f32 %v1355, %v1373
    %v1379 = vadd.f32 %v1356, %v1373
    %v1380 = vadd.f32 %v1357, %v1373
    %v1381 = vadd.f32 %v1358, %v1373
    %v1382 = vadd.f32 %v1359, %v1373
    %v1383 = vadd.f32 %v1360, %v1373
    %v1384 = vadd.f32 %v1361, %v1373
    %v1385 = vadd.f32 %v1362, %v1373
    %v1386 = vadd.f32 %v1363, %v1373
    %v1387 = vadd.f32 %v1364, %v1373
    %v1388 = vadd.f32 %v1365, %v1373
    %v1389 = vadd.f32 %v1366, %v1373
    %v1390 = vadd.f32 %v1367, %v1373
    %v1391 = vpack.c.bf16 %v1376, %v1375
    %v1392 = vpack.c.bf16 %v1378, %v1377
    %v1393 = vpack.c.bf16 %v1380, %v1379
    %v1394 = vpack.c.bf16 %v1382, %v1381
    %v1395 = vpack.c.bf16 %v1384, %v1383
    %v1396 = vpack.c.bf16 %v1386, %v1385
    %v1397 = vpack.c.bf16 %v1388, %v1387
    %v1398 = vpack.c.bf16 %v1390, %v1389
    %1399 = vmatprep.subr.bf16.mxu0 0
    %1400 = vmatpush1.bf16.msra.mxu0 %v1391
    %1401 = vmatprep.subr.bf16.mxu0 0
    %1402 = vmatpush1.bf16.msra.mxu0 %v1392
    %1403 = vmatprep.subr.bf16.mxu0 0
    %1404 = vmatpush1.bf16.msra.mxu0 %v1393
    %1405 = vmatprep.subr.bf16.mxu0 0
    %1406 = vmatpush1.bf16.msra.mxu0 %v1394
    %1407 = vmatprep.subr.bf16.mxu0 0
    %1408 = vmatpush1.bf16.msra.mxu0 %v1395
    %1409 = vmatprep.subr.bf16.mxu0 0
    %1410 = vmatpush1.bf16.msra.mxu0 %v1396
    %1411 = vmatprep.subr.bf16.mxu0 0
    %1412 = vmatpush1.bf16.msra.mxu0 %v1397
    %1413 = vmatprep.subr.bf16.mxu0 0
    %1414 = vmatpush1.bf16.msra.mxu0 %v1398
    %1415 = vmatprep.subr.bf16.mxu0 0
    %1416 = vmatpush1.bf16.msra.mxu0 0
    %1417 = vmatprep.subr.bf16.mxu0 0
    %1418 = vmatpush1.bf16.msra.mxu0 0
    %1419 = vmatprep.subr.bf16.mxu0 0
    %1420 = vmatpush1.bf16.msra.mxu0 0
    %1421 = vmatprep.subr.bf16.mxu0 0
    %1422 = vmatpush1.bf16.msra.mxu0 0
    %1423 = vmatprep.subr.bf16.mxu0 0
    %1424 = vmatpush1.bf16.msra.mxu0 0
    %1425 = vmatprep.subr.bf16.mxu0 0
    %1426 = vmatpush1.bf16.msra.mxu0 0
    %1427 = vmatprep.subr.bf16.mxu0 0
    %1428 = vmatpush1.bf16.msra.mxu0 0
    %1429 = vmatprep.subr.bf16.mxu0 0
    %1430 = vmatpush1.bf16.msra.mxu0 0
    %1431 = vmatprep.mubr.bf16.mxu0 0
    %1432 = vmatmul.mubr.bf16.gmra.mrb[0].mxu0 %v185
    %v1433 = vpop.f32.mrb[0].mxu0
    %v1434 = vadd.f32 0.0, %v1433
    %v1435 = vpop.f32.mrb[0].mxu0
    %v1436 = vpop.f32.mrb[0].mxu0
    %v1437 = vpop.f32.mrb[0].mxu0
    %1438 = vdwg.mxu0
    %v1439 = vmul.f32 %v1434, %v825
    %v1440 = vpack.c.bf16 %v1439, %v1439
    %v1441 = vld [vmem:[%s23 + $0x40] sm:$0xf]
    %v1442 = vld [vmem:[%s23 + $0x44] sm:$0xf]
    %v1443 = vld [vmem:[%s23 + $0x48] sm:$0xf]
    %v1444 = vld [vmem:[%s23 + $0x4c] sm:$0xf]
    %v1445 = vld [vmem:[%s23 + $0x50] sm:$0xf]
    %v1446 = vld [vmem:[%s23 + $0x54] sm:$0xf]
    %v1447 = vld [vmem:[%s23 + $0x58] sm:$0xf]
    %v1448 = vld [vmem:[%s23 + $0x5c] sm:$0xf]
    %v1449 = vld [vmem:[%s23 + $0x60] sm:$0xf]
    %v1450 = vld [vmem:[%s23 + $0x64] sm:$0xf]
    %v1451 = vld [vmem:[%s23 + $0x68] sm:$0xf]
    %v1452 = vld [vmem:[%s23 + $0x6c] sm:$0xf]
    %v1453 = vld [vmem:[%s23 + $0x70] sm:$0xf]
    %v1454 = vld [vmem:[%s23 + $0x74] sm:$0xf]
    %v1455 = vld [vmem:[%s23 + $0x78] sm:$0xf]
    %v1456 = vld [vmem:[%s23 + $0x7c] sm:$0xf]
    %v1473 = vunpack.c.l.b16 %v1441
    %v1474 = vunpack.c.l.b16 %v1442
    %v1475 = vunpack.c.l.b16 %v1443
    %v1476 = vunpack.c.l.b16 %v1444
    %v1477 = vunpack.c.l.b16 %v1445
    %v1478 = vunpack.c.l.b16 %v1446
    %v1479 = vunpack.c.l.b16 %v1447
    %v1480 = vunpack.c.l.b16 %v1448
    %v1481 = vunpack.c.l.b16 %v1449
    %v1482 = vunpack.c.l.b16 %v1450
    %v1483 = vunpack.c.l.b16 %v1451
    %v1484 = vunpack.c.l.b16 %v1452
    %v1485 = vunpack.c.l.b16 %v1453
    %v1486 = vunpack.c.l.b16 %v1454
    %v1487 = vunpack.c.l.b16 %v1455
    %v1488 = vunpack.c.l.b16 %v1456
    %v1489 = vpack.c.b16 %v1474, %v1473
    %v1490 = vpack.c.b16 %v1476, %v1475
    %v1491 = vpack.c.b16 %v1478, %v1477
    %v1492 = vpack.c.b16 %v1480, %v1479
    %v1493 = vpack.c.b16 %v1482, %v1481
    %v1494 = vpack.c.b16 %v1484, %v1483
    %v1495 = vpack.c.b16 %v1486, %v1485
    %v1496 = vpack.c.b16 %v1488, %v1487
    %1505 = vmatprep.subr.bf16.mxu0 0
    %1506 = vmatpush1.bf16.msra.mxu0 %v1489
    %1507 = vmatprep.subr.bf16.mxu0 0
    %1508 = vmatpush1.bf16.msra.mxu0 %v1490
    %1509 = vmatprep.subr.bf16.mxu0 0
    %1510 = vmatpush1.bf16.msra.mxu0 %v1491
    %1511 = vmatprep.subr.bf16.mxu0 0
    %1512 = vmatpush1.bf16.msra.mxu0 %v1492
    %1513 = vmatprep.subr.bf16.mxu0 0
    %1514 = vmatpush1.bf16.msra.mxu0 %v1493
    %1515 = vmatprep.subr.bf16.mxu0 0
    %1516 = vmatpush1.bf16.msra.mxu0 %v1494
    %1517 = vmatprep.subr.bf16.mxu0 0
    %1518 = vmatpush1.bf16.msra.mxu0 %v1495
    %1519 = vmatprep.subr.bf16.mxu0 0
    %1520 = vmatpush1.bf16.msra.mxu0 %v1496
    %1521 = vmatprep.subr.bf16.mxu0 0
    %1522 = vmatpush1.bf16.msra.mxu0 0
    %1523 = vmatprep.subr.bf16.mxu0 0
    %1524 = vmatpush1.bf16.msra.mxu0 0
    %1525 = vmatprep.subr.bf16.mxu0 0
    %1526 = vmatpush1.bf16.msra.mxu0 0
    %1527 = vmatprep.subr.bf16.mxu0 0
    %1528 = vmatpush1.bf16.msra.mxu0 0
    %1529 = vmatprep.subr.bf16.mxu0 0
    %1530 = vmatpush1.bf16.msra.mxu0 0
    %1531 = vmatprep.subr.bf16.mxu0 0
    %1532 = vmatpush1.bf16.msra.mxu0 0
    %1533 = vmatprep.subr.bf16.mxu0 0
    %1534 = vmatpush1.bf16.msra.mxu0 0
    %1535 = vmatprep.subr.bf16.mxu0 0
    %1536 = vmatpush1.bf16.msra.mxu0 0
    %1537 = vmatprep.mubr.bf16.mxu0 0
    %1538 = vmatmul.mubr.bf16.gmra.mrb[0].mxu0 %v1440
    %v1539 = vpop.f32.mrb[0].mxu0
    %v1540 = vadd.f32 0.0, %v1539
    %v1541 = vpop.f32.mrb[0].mxu0
    %v1542 = vpop.f32.mrb[0].mxu0
    %v1543 = vpop.f32.mrb[0].mxu0
    %1544 = vdwg.mxu0
    %v1561 = vunpack.c.l.b16 %v829
    %v1562 = vunpack.c.l.b16 %v830
    %v1563 = vunpack.c.l.b16 %v831
    %v1564 = vunpack.c.l.b16 %v832
    %v1565 = vunpack.c.l.b16 %v833
    %v1566 = vunpack.c.l.b16 %v834
    %v1567 = vunpack.c.l.b16 %v835
    %v1568 = vunpack.c.l.b16 %v836
    %v1569 = vunpack.c.l.b16 %v837
    %v1570 = vunpack.c.l.b16 %v838
    %v1571 = vunpack.c.l.b16 %v839
    %v1572 = vunpack.c.l.b16 %v840
    %v1573 = vunpack.c.l.b16 %v841
    %v1574 = vunpack.c.l.b16 %v842
    %v1575 = vunpack.c.l.b16 %v843
    %v1576 = vunpack.c.l.b16 %v844
    %v1577 = vpack.c.b16 %v1562, %v1561
    %v1578 = vpack.c.b16 %v1564, %v1563
    %v1579 = vpack.c.b16 %v1566, %v1565
    %v1580 = vpack.c.b16 %v1568, %v1567
    %v1581 = vpack.c.b16 %v1570, %v1569
    %v1582 = vpack.c.b16 %v1572, %v1571
    %v1583 = vpack.c.b16 %v1574, %v1573
    %v1584 = vpack.c.b16 %v1576, %v1575
    %1593 = vmatprep.subr.bf16.mxu0 0
    %1594 = vmatpush1.bf16.msra.mxu0 %v1577
    %1595 = vmatprep.subr.bf16.mxu0 0
    %1596 = vmatpush1.bf16.msra.mxu0 %v1578
    %1597 = vmatprep.subr.bf16.mxu0 0
    %1598 = vmatpush1.bf16.msra.mxu0 %v1579
    %1599 = vmatprep.subr.bf16.mxu0 0
    %1600 = vmatpush1.bf16.msra.mxu0 %v1580
    %1601 = vmatprep.subr.bf16.mxu0 0
    %1602 = vmatpush1.bf16.msra.mxu0 %v1581
    %1603 = vmatprep.subr.bf16.mxu0 0
    %1604 = vmatpush1.bf16.msra.mxu0 %v1582
    %1605 = vmatprep.subr.bf16.mxu0 0
    %1606 = vmatpush1.bf16.msra.mxu0 %v1583
    %1607 = vmatprep.subr.bf16.mxu0 0
    %1608 = vmatpush1.bf16.msra.mxu0 %v1584
    %1609 = vmatprep.subr.bf16.mxu0 0
    %1610 = vmatpush1.bf16.msra.mxu0 0
    %1611 = vmatprep.subr.bf16.mxu0 0
    %1612 = vmatpush1.bf16.msra.mxu0 0
    %1613 = vmatprep.subr.bf16.mxu0 0
    %1614 = vmatpush1.bf16.msra.mxu0 0
    %1615 = vmatprep.subr.bf16.mxu0 0
    %1616 = vmatpush1.bf16.msra.mxu0 0
    %1617 = vmatprep.subr.bf16.mxu0 0
    %1618 = vmatpush1.bf16.msra.mxu0 0
    %1619 = vmatprep.subr.bf16.mxu0 0
    %1620 = vmatpush1.bf16.msra.mxu0 0
    %1621 = vmatprep.subr.bf16.mxu0 0
    %1622 = vmatpush1.bf16.msra.mxu0 0
    %1623 = vmatprep.subr.bf16.mxu0 0
    %1624 = vmatpush1.bf16.msra.mxu0 0
    %1625 = vmatprep.mubr.bf16.mxu0 0
    %1626 = vmatmul.mubr.bf16.gmra.mrb[0].mxu0 %v828
    %v1627 = vpop.f32.mrb[0].mxu0
    %v1628 = vadd.f32 %v1540, %v1627
    %v1629 = vpop.f32.mrb[0].mxu0
    %v1630 = vpop.f32.mrb[0].mxu0
    %v1631 = vpop.f32.mrb[0].mxu0
    %1632 = vdwg.mxu0
    %s1633 = sld [smem:[#allocation2 + $0x2]]
    %s1634 = sadd.f32 %s1633, 1.0
    %v1635 = vstv %s1634
    %v1636 = vmul.f32 %v1635, %v1375
    %v1637 = vmul.f32 %v1635, %v1376
    %v1638 = vmul.f32 %v1635, %v1377
    %v1639 = vmul.f32 %v1635, %v1378
    %v1640 = vmul.f32 %v1635, %v1379
    %v1641 = vmul.f32 %v1635, %v1380
    %v1642 = vmul.f32 %v1635, %v1381
    %v1643 = vmul.f32 %v1635, %v1382
    %v1644 = vmul.f32 %v1635, %v1383
    %v1645 = vmul.f32 %v1635, %v1384
    %v1646 = vmul.f32 %v1635, %v1385
    %v1647 = vmul.f32 %v1635, %v1386
    %v1648 = vmul.f32 %v1635, %v1387
    %v1649 = vmul.f32 %v1635, %v1388
    %v1650 = vmul.f32 %v1635, %v1389
    %v1651 = vmul.f32 %v1635, %v1390
    %1652 = vmatprep.subr.bf16.mxu0 0
    %1653 = vmatpush1.bf16.msra.mxu0 %v1391
    %1654 = vmatprep.subr.bf16.mxu0 0
    %1655 = vmatpush1.bf16.msra.mxu0 %v1392
    %1656 = vmatprep.subr.bf16.mxu0 0
    %1657 = vmatpush1.bf16.msra.mxu0 %v1393
    %1658 = vmatprep.subr.bf16.mxu0 0
    %1659 = vmatpush1.bf16.msra.mxu0 %v1394
    %1660 = vmatprep.subr.bf16.mxu0 0
    %1661 = vmatpush1.bf16.msra.mxu0 %v1395
    %1662 = vmatprep.subr.bf16.mxu0 0
    %1663 = vmatpush1.bf16.msra.mxu0 %v1396
    %1664 = vmatprep.subr.bf16.mxu0 0
    %1665 = vmatpush1.bf16.msra.mxu0 %v1397
    %1666 = vmatprep.subr.bf16.mxu0 0
    %1667 = vmatpush1.bf16.msra.mxu0 %v1398
    %1668 = vmatprep.subr.bf16.mxu0 0
    %1669 = vmatpush1.bf16.msra.mxu0 0
    %1670 = vmatprep.subr.bf16.mxu0 0
    %1671 = vmatpush1.bf16.msra.mxu0 0
    %1672 = vmatprep.subr.bf16.mxu0 0
    %1673 = vmatpush1.bf16.msra.mxu0 0
    %1674 = vmatprep.subr.bf16.mxu0 0
    %1675 = vmatpush1.bf16.msra.mxu0 0
    %1676 = vmatprep.subr.bf16.mxu0 0
    %1677 = vmatpush1.bf16.msra.mxu0 0
    %1678 = vmatprep.subr.bf16.mxu0 0
    %1679 = vmatpush1.bf16.msra.mxu0 0
    %1680 = vmatprep.subr.bf16.mxu0 0
    %1681 = vmatpush1.bf16.msra.mxu0 0
    %1682 = vmatprep.subr.bf16.mxu0 0
    %1683 = vmatpush1.bf16.msra.mxu0 0
    %1684 = vmatprep.mubr.bf16.mxu0 0
    %1685 = vmatmul.mubr.bf16.gmra.mrb[0].mxu0 %v262
    %v1686 = vpop.f32.mrb[0].mxu0
    %v1687 = vadd.f32 %v1636, %v1686
    %v1688 = vpop.f32.mrb[0].mxu0
    %v1689 = vpop.f32.mrb[0].mxu0
    %v1690 = vadd.f32 %v1637, %v1689
    %v1691 = vpop.f32.mrb[0].mxu0
    %1692 = vmatprep.mubr.bf16.mxu0 0
    %1693 = vmatmul.mubr.bf16.gmra.mrb[0].mxu0 %v263
    %v1694 = vpop.f32.mrb[0].mxu0
    %v1695 = vadd.f32 %v1638, %v1694
    %v1696 = vpop.f32.mrb[0].mxu0
    %v1697 = vpop.f32.mrb[0].mxu0
    %v1698 = vadd.f32 %v1639, %v1697
    %v1699 = vpop.f32.mrb[0].mxu0
    %1700 = vmatprep.mubr.bf16.mxu0 0
    %1701 = vmatmul.mubr.bf16.gmra.mrb[0].mxu0 %v264
    %v1702 = vpop.f32.mrb[0].mxu0
    %v1703 = vadd.f32 %v1640, %v1702
    %v1704 = vpop.f32.mrb[0].mxu0
    %v1705 = vpop.f32.mrb[0].mxu0
    %v1706 = vadd.f32 %v1641, %v1705
    %v1707 = vpop.f32.mrb[0].mxu0
    %1708 = vmatprep.mubr.bf16.mxu0 0
    %1709 = vmatmul.mubr.bf16.gmra.mrb[0].mxu0 %v265
    %v1710 = vpop.f32.mrb[0].mxu0
    %v1711 = vadd.f32 %v1642, %v1710
    %v1712 = vpop.f32.mrb[0].mxu0
    %v1713 = vpop.f32.mrb[0].mxu0
    %v1714 = vadd.f32 %v1643, %v1713
    %v1715 = vpop.f32.mrb[0].mxu0
    %1716 = vmatprep.mubr.bf16.mxu0 0
    %1717 = vmatmul.mubr.bf16.gmra.mrb[0].mxu0 %v266
    %v1718 = vpop.f32.mrb[0].mxu0
    %v1719 = vadd.f32 %v1644, %v1718
    %v1720 = vpop.f32.mrb[0].mxu0
    %v1721 = vpop.f32.mrb[0].mxu0
    %v1722 = vadd.f32 %v1645, %v1721
    %v1723 = vpop.f32.mrb[0].mxu0
    %1724 = vmatprep.mubr.bf16.mxu0 0
    %1725 = vmatmul.mubr.bf16.gmra.mrb[0].mxu0 %v267
    %v1726 = vpop.f32.mrb[0].mxu0
    %v1727 = vadd.f32 %v1646, %v1726
    %v1728 = vpop.f32.mrb[0].mxu0
    %v1729 = vpop.f32.mrb[0].mxu0
    %v1730 = vadd.f32 %v1647, %v1729
    %v1731 = vpop.f32.mrb[0].mxu0
    %1732 = vmatprep.mubr.bf16.mxu0 0
    %1733 = vmatmul.mubr.bf16.gmra.mrb[0].mxu0 %v268
    %v1734 = vpop.f32.mrb[0].mxu0
    %v1735 = vadd.f32 %v1648, %v1734
    %v1736 = vpop.f32.mrb[0].mxu0
    %v1737 = vpop.f32.mrb[0].mxu0
    %v1738 = vadd.f32 %v1649, %v1737
    %v1739 = vpop.f32.mrb[0].mxu0
    %1740 = vmatprep.mubr.bf16.mxu0 0
    %1741 = vmatmul.mubr.bf16.gmra.mrb[0].mxu0 %v269
    %v1742 = vpop.f32.mrb[0].mxu0
    %v1743 = vadd.f32 %v1650, %v1742
    %v1744 = vpop.f32.mrb[0].mxu0
    %v1745 = vpop.f32.mrb[0].mxu0
    %v1746 = vadd.f32 %v1651, %v1745
    %v1747 = vpop.f32.mrb[0].mxu0
    %1748 = vdwg.mxu0
    %v1749 = vpack.c.bf16 %v1690, %v1687
    %v1750 = vpack.c.bf16 %v1698, %v1695
    %v1751 = vpack.c.bf16 %v1706, %v1703
    %v1752 = vpack.c.bf16 %v1714, %v1711
    %v1753 = vpack.c.bf16 %v1722, %v1719
    %v1754 = vpack.c.bf16 %v1730, %v1727
    %v1755 = vpack.c.bf16 %v1738, %v1735
    %v1756 = vpack.c.bf16 %v1746, %v1743
    %v1757 = vld [vmem:[#allocation10] sm:$0xf]
    %v1758 = vld [vmem:[#allocation10 + $0x4] sm:$0xf]
    %v1759 = vld [vmem:[#allocation10 + $0x8] sm:$0xf]
    %v1760 = vld [vmem:[#allocation10 + $0xc] sm:$0xf]
    %v1761 = vld [vmem:[#allocation10 + $0x10] sm:$0xf]
    %v1762 = vld [vmem:[#allocation10 + $0x14] sm:$0xf]
    %v1763 = vld [vmem:[#allocation10 + $0x18] sm:$0xf]
    %v1764 = vld [vmem:[#allocation10 + $0x1c] sm:$0xf]
    %v1765 = vld [vmem:[#allocation10 + $0x20] sm:$0xf]
    %v1766 = vld [vmem:[#allocation10 + $0x24] sm:$0xf]
    %v1767 = vld [vmem:[#allocation10 + $0x28] sm:$0xf]
    %v1768 = vld [vmem:[#allocation10 + $0x2c] sm:$0xf]
    %v1769 = vld [vmem:[#allocation10 + $0x30] sm:$0xf]
    %v1770 = vld [vmem:[#allocation10 + $0x34] sm:$0xf]
    %v1771 = vld [vmem:[#allocation10 + $0x38] sm:$0xf]
    %v1772 = vld [vmem:[#allocation10 + $0x3c] sm:$0xf]
    %v1773 = vld [vmem:[%s18] sm:$0x1]
    %v1775 = vlaneseq
    %v1776 = vshrl.u32 %v1775, 7
    %v1777 = vsub.s32 0, %v1776
    %v1778 = vrot.slane %v1773, %v1777
    %v1796 = vunpack.c.l.b16 %v1757
    %v1797 = vunpack.c.l.b16 %v1758
    %v1798 = vunpack.c.l.b16 %v1759
    %v1799 = vunpack.c.l.b16 %v1760
    %v1800 = vunpack.c.l.b16 %v1761
    %v1801 = vunpack.c.l.b16 %v1762
    %v1802 = vunpack.c.l.b16 %v1763
    %v1803 = vunpack.c.l.b16 %v1764
    %v1804 = vunpack.c.l.b16 %v1765
    %v1805 = vunpack.c.l.b16 %v1766
    %v1806 = vunpack.c.l.b16 %v1767
    %v1807 = vunpack.c.l.b16 %v1768
    %v1808 = vunpack.c.l.b16 %v1769
    %v1809 = vunpack.c.l.b16 %v1770
    %v1810 = vunpack.c.l.b16 %v1771
    %v1811 = vunpack.c.l.b16 %v1772
    %v1812 = vpack.c.b16 %v1797, %v1796
    %v1813 = vpack.c.b16 %v1799, %v1798
    %v1814 = vpack.c.b16 %v1801, %v1800
    %v1815 = vpack.c.b16 %v1803, %v1802
    %v1816 = vpack.c.b16 %v1805, %v1804
    %v1817 = vpack.c.b16 %v1807, %v1806
    %v1818 = vpack.c.b16 %v1809, %v1808
    %v1819 = vpack.c.b16 %v1811, %v1810
    %1828 = vmatprep.subr.bf16.mxu0 0
    %1829 = vmatpush1.bf16.msra.mxu0 %v1812
    %1830 = vmatprep.subr.bf16.mxu0 0
    %1831 = vmatpush1.bf16.msra.mxu0 %v1813
    %1832 = vmatprep.subr.bf16.mxu0 0
    %1833 = vmatpush1.bf16.msra.mxu0 %v1814
    %1834 = vmatprep.subr.bf16.mxu0 0
    %1835 = vmatpush1.bf16.msra.mxu0 %v1815
    %1836 = vmatprep.subr.bf16.mxu0 0
    %1837 = vmatpush1.bf16.msra.mxu0 %v1816
    %1838 = vmatprep.subr.bf16.mxu0 0
    %1839 = vmatpush1.bf16.msra.mxu0 %v1817
    %1840 = vmatprep.subr.bf16.mxu0 0
    %1841 = vmatpush1.bf16.msra.mxu0 %v1818
    %1842 = vmatprep.subr.bf16.mxu0 0
    %1843 = vmatpush1.bf16.msra.mxu0 %v1819
    %1844 = vmatprep.subr.bf16.mxu0 0
    %1845 = vmatpush1.bf16.msra.mxu0 0
    %1846 = vmatprep.subr.bf16.mxu0 0
    %1847 = vmatpush1.bf16.msra.mxu0 0
    %1848 = vmatprep.subr.bf16.mxu0 0
    %1849 = vmatpush1.bf16.msra.mxu0 0
    %1850 = vmatprep.subr.bf16.mxu0 0
    %1851 = vmatpush1.bf16.msra.mxu0 0
    %1852 = vmatprep.subr.bf16.mxu0 0
    %1853 = vmatpush1.bf16.msra.mxu0 0
    %1854 = vmatprep.subr.bf16.mxu0 0
    %1855 = vmatpush1.bf16.msra.mxu0 0
    %1856 = vmatprep.subr.bf16.mxu0 0
    %1857 = vmatpush1.bf16.msra.mxu0 0
    %1858 = vmatprep.subr.bf16.mxu0 0
    %1859 = vmatpush1.bf16.msra.mxu0 0
    %1860 = vmatprep.mubr.bf16.mxu0 0
    %1861 = vmatmul.mubr.bf16.gmra.mrb[0].mxu0 %v1749
    %v1862 = vpop.f32.mrb[0].mxu0
    %v1863 = vadd.f32 %v1778, %v1862
    %v1864 = vpop.f32.mrb[0].mxu0
    %v1865 = vpop.f32.mrb[0].mxu0
    %v1866 = vadd.f32 %v1778, %v1865
    %v1867 = vpop.f32.mrb[0].mxu0
    %1868 = vmatprep.mubr.bf16.mxu0 0
    %1869 = vmatmul.mubr.bf16.gmra.mrb[0].mxu0 %v1750
    %v1870 = vpop.f32.mrb[0].mxu0
    %v1871 = vadd.f32 %v1778, %v1870
    %v1872 = vpop.f32.mrb[0].mxu0
    %v1873 = vpop.f32.mrb[0].mxu0
    %v1874 = vadd.f32 %v1778, %v1873
    %v1875 = vpop.f32.mrb[0].mxu0
    %1876 = vmatprep.mubr.bf16.mxu0 0
    %1877 = vmatmul.mubr.bf16.gmra.mrb[0].mxu0 %v1751
    %v1878 = vpop.f32.mrb[0].mxu0
    %v1879 = vadd.f32 %v1778, %v1878
    %v1880 = vpop.f32.mrb[0].mxu0
    %v1881 = vpop.f32.mrb[0].mxu0
    %v1882 = vadd.f32 %v1778, %v1881
    %v1883 = vpop.f32.mrb[0].mxu0
    %1884 = vmatprep.mubr.bf16.mxu0 0
    %1885 = vmatmul.mubr.bf16.gmra.mrb[0].mxu0 %v1752
    %v1886 = vpop.f32.mrb[0].mxu0
    %v1887 = vadd.f32 %v1778, %v1886
    %v1888 = vpop.f32.mrb[0].mxu0
    %v1889 = vpop.f32.mrb[0].mxu0
    %v1890 = vadd.f32 %v1778, %v1889
    %v1891 = vpop.f32.mrb[0].mxu0
    %1892 = vmatprep.mubr.bf16.mxu0 0
    %1893 = vmatmul.mubr.bf16.gmra.mrb[0].mxu0 %v1753
    %v1894 = vpop.f32.mrb[0].mxu0
    %v1895 = vadd.f32 %v1778, %v1894
    %v1896 = vpop.f32.mrb[0].mxu0
    %v1897 = vpop.f32.mrb[0].mxu0
    %v1898 = vadd.f32 %v1778, %v1897
    %v1899 = vpop.f32.mrb[0].mxu0
    %1900 = vmatprep.mubr.bf16.mxu0 0
    %1901 = vmatmul.mubr.bf16.gmra.mrb[0].mxu0 %v1754
    %v1902 = vpop.f32.mrb[0].mxu0
    %v1903 = vadd.f32 %v1778, %v1902
    %v1904 = vpop.f32.mrb[0].mxu0
    %v1905 = vpop.f32.mrb[0].mxu0
    %v1906 = vadd.f32 %v1778, %v1905
    %v1907 = vpop.f32.mrb[0].mxu0
    %1908 = vmatprep.mubr.bf16.mxu0 0
    %1909 = vmatmul.mubr.bf16.gmra.mrb[0].mxu0 %v1755
    %v1910 = vpop.f32.mrb[0].mxu0
    %v1911 = vadd.f32 %v1778, %v1910
    %v1912 = vpop.f32.mrb[0].mxu0
    %v1913 = vpop.f32.mrb[0].mxu0
    %v1914 = vadd.f32 %v1778, %v1913
    %v1915 = vpop.f32.mrb[0].mxu0
    %1916 = vmatprep.mubr.bf16.mxu0 0
    %1917 = vmatmul.mubr.bf16.gmra.mrb[0].mxu0 %v1756
    %v1918 = vpop.f32.mrb[0].mxu0
    %v1919 = vadd.f32 %v1778, %v1918
    %v1920 = vpop.f32.mrb[0].mxu0
    %v1921 = vpop.f32.mrb[0].mxu0
    %v1922 = vadd.f32 %v1778, %v1921
    %v1923 = vpop.f32.mrb[0].mxu0
    %1924 = vdwg.mxu0
    %v1925 = vmax.f32 %v1863, 0.0
    %v1926 = vmax.f32 %v1866, 0.0
    %v1927 = vmax.f32 %v1871, 0.0
    %v1928 = vmax.f32 %v1874, 0.0
    %v1929 = vmax.f32 %v1879, 0.0
    %v1930 = vmax.f32 %v1882, 0.0
    %v1931 = vmax.f32 %v1887, 0.0
    %v1932 = vmax.f32 %v1890, 0.0
    %v1933 = vmax.f32 %v1895, 0.0
    %v1934 = vmax.f32 %v1898, 0.0
    %v1935 = vmax.f32 %v1903, 0.0
    %v1936 = vmax.f32 %v1906, 0.0
    %v1937 = vmax.f32 %v1911, 0.0
    %v1938 = vmax.f32 %v1914, 0.0
    %v1939 = vmax.f32 %v1919, 0.0
    %v1940 = vmax.f32 %v1922, 0.0
    %v1941 = vpack.c.bf16 %v1926, %v1925
    %v1942 = vpack.c.bf16 %v1928, %v1927
    %v1943 = vpack.c.bf16 %v1930, %v1929
    %v1944 = vpack.c.bf16 %v1932, %v1931
    %v1945 = vpack.c.bf16 %v1934, %v1933
    %v1946 = vpack.c.bf16 %v1936, %v1935
    %v1947 = vpack.c.bf16 %v1938, %v1937
    %v1948 = vpack.c.bf16 %v1940, %v1939
    %v1949 = vld [vmem:[#allocation12] sm:$0xf]
    %v1950 = vld [vmem:[#allocation12 + $0x4] sm:$0xf]
    %v1951 = vld [vmem:[#allocation12 + $0x8] sm:$0xf]
    %v1952 = vld [vmem:[#allocation12 + $0xc] sm:$0xf]
    %v1953 = vld [vmem:[#allocation12 + $0x10] sm:$0xf]
    %v1954 = vld [vmem:[#allocation12 + $0x14] sm:$0xf]
    %v1955 = vld [vmem:[#allocation12 + $0x18] sm:$0xf]
    %v1956 = vld [vmem:[#allocation12 + $0x1c] sm:$0xf]
    %v1957 = vld [vmem:[#allocation12 + $0x20] sm:$0xf]
    %v1958 = vld [vmem:[#allocation12 + $0x24] sm:$0xf]
    %v1959 = vld [vmem:[#allocation12 + $0x28] sm:$0xf]
    %v1960 = vld [vmem:[#allocation12 + $0x2c] sm:$0xf]
    %v1961 = vld [vmem:[#allocation12 + $0x30] sm:$0xf]
    %v1962 = vld [vmem:[#allocation12 + $0x34] sm:$0xf]
    %v1963 = vld [vmem:[#allocation12 + $0x38] sm:$0xf]
    %v1964 = vld [vmem:[#allocation12 + $0x3c] sm:$0xf]
    %v1965 = vld [vmem:[%s20] sm:$0x1]
    %v1967 = vlaneseq
    %v1968 = vshrl.u32 %v1967, 7
    %v1969 = vsub.s32 0, %v1968
    %v1970 = vrot.slane %v1965, %v1969
    %v1988 = vunpack.c.l.b16 %v1949
    %v1989 = vunpack.c.l.b16 %v1950
    %v1990 = vunpack.c.l.b16 %v1951
    %v1991 = vunpack.c.l.b16 %v1952
    %v1992 = vunpack.c.l.b16 %v1953
    %v1993 = vunpack.c.l.b16 %v1954
    %v1994 = vunpack.c.l.b16 %v1955
    %v1995 = vunpack.c.l.b16 %v1956
    %v1996 = vunpack.c.l.b16 %v1957
    %v1997 = vunpack.c.l.b16 %v1958
    %v1998 = vunpack.c.l.b16 %v1959
    %v1999 = vunpack.c.l.b16 %v1960
    %v2000 = vunpack.c.l.b16 %v1961
    %v2001 = vunpack.c.l.b16 %v1962
    %v2002 = vunpack.c.l.b16 %v1963
    %v2003 = vunpack.c.l.b16 %v1964
    %v2004 = vpack.c.b16 %v1989, %v1988
    %v2005 = vpack.c.b16 %v1991, %v1990
    %v2006 = vpack.c.b16 %v1993, %v1992
    %v2007 = vpack.c.b16 %v1995, %v1994
    %v2008 = vpack.c.b16 %v1997, %v1996
    %v2009 = vpack.c.b16 %v1999, %v1998
    %v2010 = vpack.c.b16 %v2001, %v2000
    %v2011 = vpack.c.b16 %v2003, %v2002
    %2020 = vmatprep.subr.bf16.mxu0 0
    %2021 = vmatpush1.bf16.msra.mxu0 %v2004
    %2022 = vmatprep.subr.bf16.mxu0 0
    %2023 = vmatpush1.bf16.msra.mxu0 %v2005
    %2024 = vmatprep.subr.bf16.mxu0 0
    %2025 = vmatpush1.bf16.msra.mxu0 %v2006
    %2026 = vmatprep.subr.bf16.mxu0 0
    %2027 = vmatpush1.bf16.msra.mxu0 %v2007
    %2028 = vmatprep.subr.bf16.mxu0 0
    %2029 = vmatpush1.bf16.msra.mxu0 %v2008
    %2030 = vmatprep.subr.bf16.mxu0 0
    %2031 = vmatpush1.bf16.msra.mxu0 %v2009
    %2032 = vmatprep.subr.bf16.mxu0 0
    %2033 = vmatpush1.bf16.msra.mxu0 %v2010
    %2034 = vmatprep.subr.bf16.mxu0 0
    %2035 = vmatpush1.bf16.msra.mxu0 %v2011
    %2036 = vmatprep.subr.bf16.mxu0 0
    %2037 = vmatpush1.bf16.msra.mxu0 0
    %2038 = vmatprep.subr.bf16.mxu0 0
    %2039 = vmatpush1.bf16.msra.mxu0 0
    %2040 = vmatprep.subr.bf16.mxu0 0
    %2041 = vmatpush1.bf16.msra.mxu0 0
    %2042 = vmatprep.subr.bf16.mxu0 0
    %2043 = vmatpush1.bf16.msra.mxu0 0
    %2044 = vmatprep.subr.bf16.mxu0 0
    %2045 = vmatpush1.bf16.msra.mxu0 0
    %2046 = vmatprep.subr.bf16.mxu0 0
    %2047 = vmatpush1.bf16.msra.mxu0 0
    %2048 = vmatprep.subr.bf16.mxu0 0
    %2049 = vmatpush1.bf16.msra.mxu0 0
    %2050 = vmatprep.subr.bf16.mxu0 0
    %2051 = vmatpush1.bf16.msra.mxu0 0
    %2052 = vmatprep.mubr.bf16.mxu0 0
    %2053 = vmatmul.mubr.bf16.gmra.mrb[0].mxu0 %v1941
    %v2054 = vpop.f32.mrb[0].mxu0
    %v2055 = vadd.f32 %v1970, %v2054
    %v2056 = vpop.f32.mrb[0].mxu0
    %v2057 = vpop.f32.mrb[0].mxu0
    %v2058 = vadd.f32 %v1970, %v2057
    %v2059 = vpop.f32.mrb[0].mxu0
    %2060 = vmatprep.mubr.bf16.mxu0 0
    %2061 = vmatmul.mubr.bf16.gmra.mrb[0].mxu0 %v1942
    %v2062 = vpop.f32.mrb[0].mxu0
    %v2063 = vadd.f32 %v1970, %v2062
    %v2064 = vpop.f32.mrb[0].mxu0
    %v2065 = vpop.f32.mrb[0].mxu0
    %v2066 = vadd.f32 %v1970, %v2065
    %v2067 = vpop.f32.mrb[0].mxu0
    %2068 = vmatprep.mubr.bf16.mxu0 0
    %2069 = vmatmul.mubr.bf16.gmra.mrb[0].mxu0 %v1943
    %v2070 = vpop.f32.mrb[0].mxu0
    %v2071 = vadd.f32 %v1970, %v2070
    %v2072 = vpop.f32.mrb[0].mxu0
    %v2073 = vpop.f32.mrb[0].mxu0
    %v2074 = vadd.f32 %v1970, %v2073
    %v2075 = vpop.f32.mrb[0].mxu0
    %2076 = vmatprep.mubr.bf16.mxu0 0
    %2077 = vmatmul.mubr.bf16.gmra.mrb[0].mxu0 %v1944
    %v2078 = vpop.f32.mrb[0].mxu0
    %v2079 = vadd.f32 %v1970, %v2078
    %v2080 = vpop.f32.mrb[0].mxu0
    %v2081 = vpop.f32.mrb[0].mxu0
    %v2082 = vadd.f32 %v1970, %v2081
    %v2083 = vpop.f32.mrb[0].mxu0
    %2084 = vmatprep.mubr.bf16.mxu0 0
    %2085 = vmatmul.mubr.bf16.gmra.mrb[0].mxu0 %v1945
    %v2086 = vpop.f32.mrb[0].mxu0
    %v2087 = vadd.f32 %v1970, %v2086
    %v2088 = vpop.f32.mrb[0].mxu0
    %v2089 = vpop.f32.mrb[0].mxu0
    %v2090 = vadd.f32 %v1970, %v2089
    %v2091 = vpop.f32.mrb[0].mxu0
    %2092 = vmatprep.mubr.bf16.mxu0 0
    %2093 = vmatmul.mubr.bf16.gmra.mrb[0].mxu0 %v1946
    %v2094 = vpop.f32.mrb[0].mxu0
    %v2095 = vadd.f32 %v1970, %v2094
    %v2096 = vpop.f32.mrb[0].mxu0
    %v2097 = vpop.f32.mrb[0].mxu0
    %v2098 = vadd.f32 %v1970, %v2097
    %v2099 = vpop.f32.mrb[0].mxu0
    %2100 = vmatprep.mubr.bf16.mxu0 0
    %2101 = vmatmul.mubr.bf16.gmra.mrb[0].mxu0 %v1947
    %v2102 = vpop.f32.mrb[0].mxu0
    %v2103 = vadd.f32 %v1970, %v2102
    %v2104 = vpop.f32.mrb[0].mxu0
    %v2105 = vpop.f32.mrb[0].mxu0
    %v2106 = vadd.f32 %v1970, %v2105
    %v2107 = vpop.f32.mrb[0].mxu0
    %2108 = vmatprep.mubr.bf16.mxu0 0
    %2109 = vmatmul.mubr.bf16.gmra.mrb[0].mxu0 %v1948
    %v2110 = vpop.f32.mrb[0].mxu0
    %v2111 = vadd.f32 %v1970, %v2110
    %v2112 = vpop.f32.mrb[0].mxu0
    %v2113 = vpop.f32.mrb[0].mxu0
    %v2114 = vadd.f32 %v1970, %v2113
    %v2115 = vpop.f32.mrb[0].mxu0
    %2116 = vdwg.mxu0
    %v2117 = vmax.f32 %v2055, 0.0
    %v2118 = vmax.f32 %v2058, 0.0
    %v2119 = vmax.f32 %v2063, 0.0
    %v2120 = vmax.f32 %v2066, 0.0
    %v2121 = vmax.f32 %v2071, 0.0
    %v2122 = vmax.f32 %v2074, 0.0
    %v2123 = vmax.f32 %v2079, 0.0
    %v2124 = vmax.f32 %v2082, 0.0
    %v2125 = vmax.f32 %v2087, 0.0
    %v2126 = vmax.f32 %v2090, 0.0
    %v2127 = vmax.f32 %v2095, 0.0
    %v2128 = vmax.f32 %v2098, 0.0
    %v2129 = vmax.f32 %v2103, 0.0
    %v2130 = vmax.f32 %v2106, 0.0
    %v2131 = vmax.f32 %v2111, 0.0
    %v2132 = vmax.f32 %v2114, 0.0
    %v2133 = vld [vmem:[%s21] sm:$0x1]
    %v2135 = vlaneseq
    %v2136 = vshrl.u32 %v2135, 7
    %v2137 = vsub.s32 0, %v2136
    %v2138 = vrot.slane %v2133, %v2137
    %v2140 = vmul.f32 %v2117, %v2138
    %v2141 = vmul.f32 %v2118, %v2138
    %v2142 = vmul.f32 %v2119, %v2138
    %v2143 = vmul.f32 %v2120, %v2138
    %v2144 = vmul.f32 %v2121, %v2138
    %v2145 = vmul.f32 %v2122, %v2138
    %v2146 = vmul.f32 %v2123, %v2138
    %v2147 = vmul.f32 %v2124, %v2138
    %v2148 = vmul.f32 %v2125, %v2138
    %v2149 = vmul.f32 %v2126, %v2138
    %v2150 = vmul.f32 %v2127, %v2138
    %v2151 = vmul.f32 %v2128, %v2138
    %v2152 = vmul.f32 %v2129, %v2138
    %v2153 = vmul.f32 %v2130, %v2138
    %v2154 = vmul.f32 %v2131, %v2138
    %v2155 = vmul.f32 %v2132, %v2138
    %v2156 = vld [vmem:[%s22] sm:$0x1]
    %v2158 = vlaneseq
    %v2159 = vshrl.u32 %v2158, 7
    %v2160 = vsub.s32 0, %v2159
    %v2161 = vrot.slane %v2156, %v2160
    %v2163 = vadd.f32 %v2140, %v2161
    %v2164 = vadd.f32 %v2141, %v2161
    %v2165 = vadd.f32 %v2142, %v2161
    %v2166 = vadd.f32 %v2143, %v2161
    %v2167 = vadd.f32 %v2144, %v2161
    %v2168 = vadd.f32 %v2145, %v2161
    %v2169 = vadd.f32 %v2146, %v2161
    %v2170 = vadd.f32 %v2147, %v2161
    %v2171 = vadd.f32 %v2148, %v2161
    %v2172 = vadd.f32 %v2149, %v2161
    %v2173 = vadd.f32 %v2150, %v2161
    %v2174 = vadd.f32 %v2151, %v2161
    %v2175 = vadd.f32 %v2152, %v2161
    %v2176 = vadd.f32 %v2153, %v2161
    %v2177 = vadd.f32 %v2154, %v2161
    %v2178 = vadd.f32 %v2155, %v2161
    %v2179 = vpack.c.bf16 %v2164, %v2163
    %v2180 = vpack.c.bf16 %v2166, %v2165
    %v2181 = vpack.c.bf16 %v2168, %v2167
    %v2182 = vpack.c.bf16 %v2170, %v2169
    %v2183 = vpack.c.bf16 %v2172, %v2171
    %v2184 = vpack.c.bf16 %v2174, %v2173
    %v2185 = vpack.c.bf16 %v2176, %v2175
    %v2186 = vpack.c.bf16 %v2178, %v2177
    %2187 = vmatprep.subr.bf16.mxu0 0
    %2188 = vmatpush1.bf16.msra.mxu0 %v2179
    %2189 = vmatprep.subr.bf16.mxu0 0
    %2190 = vmatpush1.bf16.msra.mxu0 %v2180
    %2191 = vmatprep.subr.bf16.mxu0 0
    %2192 = vmatpush1.bf16.msra.mxu0 %v2181
    %2193 = vmatprep.subr.bf16.mxu0 0
    %2194 = vmatpush1.bf16.msra.mxu0 %v2182
    %2195 = vmatprep.subr.bf16.mxu0 0
    %2196 = vmatpush1.bf16.msra.mxu0 %v2183
    %2197 = vmatprep.subr.bf16.mxu0 0
    %2198 = vmatpush1.bf16.msra.mxu0 %v2184
    %2199 = vmatprep.subr.bf16.mxu0 0
    %2200 = vmatpush1.bf16.msra.mxu0 %v2185
    %2201 = vmatprep.subr.bf16.mxu0 0
    %2202 = vmatpush1.bf16.msra.mxu0 %v2186
    %2203 = vmatprep.subr.bf16.mxu0 0
    %2204 = vmatpush1.bf16.msra.mxu0 0
    %2205 = vmatprep.subr.bf16.mxu0 0
    %2206 = vmatpush1.bf16.msra.mxu0 0
    %2207 = vmatprep.subr.bf16.mxu0 0
    %2208 = vmatpush1.bf16.msra.mxu0 0
    %2209 = vmatprep.subr.bf16.mxu0 0
    %2210 = vmatpush1.bf16.msra.mxu0 0
    %2211 = vmatprep.subr.bf16.mxu0 0
    %2212 = vmatpush1.bf16.msra.mxu0 0
    %2213 = vmatprep.subr.bf16.mxu0 0
    %2214 = vmatpush1.bf16.msra.mxu0 0
    %2215 = vmatprep.subr.bf16.mxu0 0
    %2216 = vmatpush1.bf16.msra.mxu0 0
    %2217 = vmatprep.subr.bf16.mxu0 0
    %2218 = vmatpush1.bf16.msra.mxu0 0
    %2219 = vmatprep.mubr.bf16.mxu0 0
    %2220 = vmatmul.mubr.bf16.gmra.mrb[0].mxu0 %v185
    %v2221 = vpop.f32.mrb[0].mxu0
    %v2222 = vadd.f32 0.0, %v2221
    %v2223 = vpop.f32.mrb[0].mxu0
    %v2224 = vpop.f32.mrb[0].mxu0
    %v2225 = vpop.f32.mrb[0].mxu0
    %2226 = vdwg.mxu0
    %v2227 = vmul.f32 %v2222, %v825
    %v2228 = vpack.c.bf16 %v2227, %v2227
    %v2229 = vld [vmem:[%s23 + $0x80] sm:$0xf]
    %v2230 = vld [vmem:[%s23 + $0x84] sm:$0xf]
    %v2231 = vld [vmem:[%s23 + $0x88] sm:$0xf]
    %v2232 = vld [vmem:[%s23 + $0x8c] sm:$0xf]
    %v2233 = vld [vmem:[%s23 + $0x90] sm:$0xf]
    %v2234 = vld [vmem:[%s23 + $0x94] sm:$0xf]
    %v2235 = vld [vmem:[%s23 + $0x98] sm:$0xf]
    %v2236 = vld [vmem:[%s23 + $0x9c] sm:$0xf]
    %v2237 = vld [vmem:[%s23 + $0xa0] sm:$0xf]
    %v2238 = vld [vmem:[%s23 + $0xa4] sm:$0xf]
    %v2239 = vld [vmem:[%s23 + $0xa8] sm:$0xf]
    %v2240 = vld [vmem:[%s23 + $0xac] sm:$0xf]
    %v2241 = vld [vmem:[%s23 + $0xb0] sm:$0xf]
    %v2242 = vld [vmem:[%s23 + $0xb4] sm:$0xf]
    %v2243 = vld [vmem:[%s23 + $0xb8] sm:$0xf]
    %v2244 = vld [vmem:[%s23 + $0xbc] sm:$0xf]
    %v2261 = vunpack.c.l.b16 %v2229
    %v2262 = vunpack.c.l.b16 %v2230
    %v2263 = vunpack.c.l.b16 %v2231
    %v2264 = vunpack.c.l.b16 %v2232
    %v2265 = vunpack.c.l.b16 %v2233
    %v2266 = vunpack.c.l.b16 %v2234
    %v2267 = vunpack.c.l.b16 %v2235
    %v2268 = vunpack.c.l.b16 %v2236
    %v2269 = vunpack.c.l.b16 %v2237
    %v2270 = vunpack.c.l.b16 %v2238
    %v2271 = vunpack.c.l.b16 %v2239
    %v2272 = vunpack.c.l.b16 %v2240
    %v2273 = vunpack.c.l.b16 %v2241
    %v2274 = vunpack.c.l.b16 %v2242
    %v2275 = vunpack.c.l.b16 %v2243
    %v2276 = vunpack.c.l.b16 %v2244
    %v2277 = vpack.c.b16 %v2262, %v2261
    %v2278 = vpack.c.b16 %v2264, %v2263
    %v2279 = vpack.c.b16 %v2266, %v2265
    %v2280 = vpack.c.b16 %v2268, %v2267
    %v2281 = vpack.c.b16 %v2270, %v2269
    %v2282 = vpack.c.b16 %v2272, %v2271
    %v2283 = vpack.c.b16 %v2274, %v2273
    %v2284 = vpack.c.b16 %v2276, %v2275
    %2293 = vmatprep.subr.bf16.mxu0 0
    %2294 = vmatpush1.bf16.msra.mxu0 %v2277
    %2295 = vmatprep.subr.bf16.mxu0 0
    %2296 = vmatpush1.bf16.msra.mxu0 %v2278
    %2297 = vmatprep.subr.bf16.mxu0 0
    %2298 = vmatpush1.bf16.msra.mxu0 %v2279
    %2299 = vmatprep.subr.bf16.mxu0 0
    %2300 = vmatpush1.bf16.msra.mxu0 %v2280
    %2301 = vmatprep.subr.bf16.mxu0 0
    %2302 = vmatpush1.bf16.msra.mxu0 %v2281
    %2303 = vmatprep.subr.bf16.mxu0 0
    %2304 = vmatpush1.bf16.msra.mxu0 %v2282
    %2305 = vmatprep.subr.bf16.mxu0 0
    %2306 = vmatpush1.bf16.msra.mxu0 %v2283
    %2307 = vmatprep.subr.bf16.mxu0 0
    %2308 = vmatpush1.bf16.msra.mxu0 %v2284
    %2309 = vmatprep.subr.bf16.mxu0 0
    %2310 = vmatpush1.bf16.msra.mxu0 0
    %2311 = vmatprep.subr.bf16.mxu0 0
    %2312 = vmatpush1.bf16.msra.mxu0 0
    %2313 = vmatprep.subr.bf16.mxu0 0
    %2314 = vmatpush1.bf16.msra.mxu0 0
    %2315 = vmatprep.subr.bf16.mxu0 0
    %2316 = vmatpush1.bf16.msra.mxu0 0
    %2317 = vmatprep.subr.bf16.mxu0 0
    %2318 = vmatpush1.bf16.msra.mxu0 0
    %2319 = vmatprep.subr.bf16.mxu0 0
    %2320 = vmatpush1.bf16.msra.mxu0 0
    %2321 = vmatprep.subr.bf16.mxu0 0
    %2322 = vmatpush1.bf16.msra.mxu0 0
    %2323 = vmatprep.subr.bf16.mxu0 0
    %2324 = vmatpush1.bf16.msra.mxu0 0
    %2325 = vmatprep.mubr.bf16.mxu0 0
    %2326 = vmatmul.mubr.bf16.gmra.mrb[0].mxu0 %v2228
    %v2327 = vpop.f32.mrb[0].mxu0
    %v2328 = vadd.f32 0.0, %v2327
    %v2329 = vpop.f32.mrb[0].mxu0
    %v2330 = vpop.f32.mrb[0].mxu0
    %v2331 = vpop.f32.mrb[0].mxu0
    %2332 = vdwg.mxu0
    %v2333 = vadd.f32 %v1628, %v2328
    %v2334 = vld [vmem:[%s24] sm:$0x1]
    %v2336 = vlaneseq
    %v2337 = vshrl.u32 %v2336, 7
    %v2338 = vsub.s32 0, %v2337
    %v2339 = vrot.slane %v2334, %v2338
    %v2341 = vadd.f32 %v2333, %v2339
    %v2342 = vmax.f32 %v2341, 0.0
    %v2343 = vpack.c.bf16 %v2342, %v2342
    %v2344 = vld [vmem:[%s25] sm:$0xf]
    %v2345 = vld [vmem:[%s25 + $0x4] sm:$0xf]
    %v2346 = vld [vmem:[%s25 + $0x8] sm:$0xf]
    %v2347 = vld [vmem:[%s25 + $0xc] sm:$0xf]
    %v2348 = vld [vmem:[%s25 + $0x10] sm:$0xf]
    %v2349 = vld [vmem:[%s25 + $0x14] sm:$0xf]
    %v2350 = vld [vmem:[%s25 + $0x18] sm:$0xf]
    %v2351 = vld [vmem:[%s25 + $0x1c] sm:$0xf]
    %v2352 = vld [vmem:[%s25 + $0x20] sm:$0xf]
    %v2353 = vld [vmem:[%s25 + $0x24] sm:$0xf]
    %v2354 = vld [vmem:[%s25 + $0x28] sm:$0xf]
    %v2355 = vld [vmem:[%s25 + $0x2c] sm:$0xf]
    %v2356 = vld [vmem:[%s25 + $0x30] sm:$0xf]
    %v2357 = vld [vmem:[%s25 + $0x34] sm:$0xf]
    %v2358 = vld [vmem:[%s25 + $0x38] sm:$0xf]
    %v2359 = vld [vmem:[%s25 + $0x3c] sm:$0xf]
    %v2360 = vld [vmem:[%s26] sm:$0x1]
    %v2362 = vlaneseq
    %v2363 = vshrl.u32 %v2362, 7
    %v2364 = vsub.s32 0, %v2363
    %v2365 = vrot.slane %v2360, %v2364
    %v2383 = vunpack.c.l.b16 %v2344
    %v2384 = vunpack.c.l.b16 %v2345
    %v2385 = vunpack.c.l.b16 %v2346
    %v2386 = vunpack.c.l.b16 %v2347
    %v2387 = vunpack.c.l.b16 %v2348
    %v2388 = vunpack.c.l.b16 %v2349
    %v2389 = vunpack.c.l.b16 %v2350
    %v2390 = vunpack.c.l.b16 %v2351
    %v2391 = vunpack.c.l.b16 %v2352
    %v2392 = vunpack.c.l.b16 %v2353
    %v2393 = vunpack.c.l.b16 %v2354
    %v2394 = vunpack.c.l.b16 %v2355
    %v2395 = vunpack.c.l.b16 %v2356
    %v2396 = vunpack.c.l.b16 %v2357
    %v2397 = vunpack.c.l.b16 %v2358
    %v2398 = vunpack.c.l.b16 %v2359
    %v2399 = vpack.c.b16 %v2384, %v2383
    %v2400 = vpack.c.b16 %v2386, %v2385
    %v2401 = vpack.c.b16 %v2388, %v2387
    %v2402 = vpack.c.b16 %v2390, %v2389
    %v2403 = vpack.c.b16 %v2392, %v2391
    %v2404 = vpack.c.b16 %v2394, %v2393
    %v2405 = vpack.c.b16 %v2396, %v2395
    %v2406 = vpack.c.b16 %v2398, %v2397
    %2415 = vmatprep.subr.bf16.mxu0 0
    %2416 = vmatpush1.bf16.msra.mxu0 %v2399
    %2417 = vmatprep.subr.bf16.mxu0 0
    %2418 = vmatpush1.bf16.msra.mxu0 %v2400
    %2419 = vmatprep.subr.bf16.mxu0 0
    %2420 = vmatpush1.bf16.msra.mxu0 %v2401
    %2421 = vmatprep.subr.bf16.mxu0 0
    %2422 = vmatpush1.bf16.msra.mxu0 %v2402
    %2423 = vmatprep.subr.bf16.mxu0 0
    %2424 = vmatpush1.bf16.msra.mxu0 %v2403
    %2425 = vmatprep.subr.bf16.mxu0 0
    %2426 = vmatpush1.bf16.msra.mxu0 %v2404
    %2427 = vmatprep.subr.bf16.mxu0 0
    %2428 = vmatpush1.bf16.msra.mxu0 %v2405
    %2429 = vmatprep.subr.bf16.mxu0 0
    %2430 = vmatpush1.bf16.msra.mxu0 %v2406
    %2431 = vmatprep.subr.bf16.mxu0 0
    %2432 = vmatpush1.bf16.msra.mxu0 0
    %2433 = vmatprep.subr.bf16.mxu0 0
    %2434 = vmatpush1.bf16.msra.mxu0 0
    %2435 = vmatprep.subr.bf16.mxu0 0
    %2436 = vmatpush1.bf16.msra.mxu0 0
    %2437 = vmatprep.subr.bf16.mxu0 0
    %2438 = vmatpush1.bf16.msra.mxu0 0
    %2439 = vmatprep.subr.bf16.mxu0 0
    %2440 = vmatpush1.bf16.msra.mxu0 0
    %2441 = vmatprep.subr.bf16.mxu0 0
    %2442 = vmatpush1.bf16.msra.mxu0 0
    %2443 = vmatprep.subr.bf16.mxu0 0
    %2444 = vmatpush1.bf16.msra.mxu0 0
    %2445 = vmatprep.subr.bf16.mxu0 0
    %2446 = vmatpush1.bf16.msra.mxu0 0
    %2447 = vmatprep.mubr.bf16.mxu0 0
    %2448 = vmatmul.mubr.bf16.gmra.mrb[0].mxu0 %v2343
    %v2449 = vpop.f32.mrb[0].mxu0
    %v2450 = vadd.f32 %v2365, %v2449
    %v2451 = vpop.f32.mrb[0].mxu0
    %v2452 = vpop.f32.mrb[0].mxu0
    %v2453 = vpop.f32.mrb[0].mxu0
    %2454 = vdwg.mxu0
    %vm2455 = vcmask 60416
    %v2456 = vsel %vm2455, %v2450, -inf
    %2457 = vmax.xlane.f32.xlu0 %v2456
    %v2458 = vpop.xlane.xlu0 %2457
    %v2459 = vsub.f32 %v2450, %v2458
    %v2460 = vmul.f32 %v2459, 1.442695
    %v2461 = vpow.pop %v2460
    %v2462 = vsel %vm2455, %v2461, 0.0
    %2463 = vadd.xlane.f32.xlu0 %v2462
    %v2464 = vpop.xlane.xlu0 %2463
    %v2465 = vlog2.pop %v2464
    %v2466 = vmul.f32 %v2465, 0.6931472
    %v2467 = vadd.f32 %v2466, %v2458
    %v2468 = vsub.f32 %v2450, %v2467
    %2469 = vst.msk [vmem:[#allocation13] sm:$0xf] %vm2455, %v2468
    // Predicated region
    $region134: #{tpu_custom_call.1} parent=1 // pred_check
      _
    $region135: #{tpu_custom_call.1} parent=1 // pred_check_branch
      %2471 = sbr.rel (0) target = $region137
    $region136: #{tpu_custom_call.1} parent=1 // pred_region
      %s2473 = ssub.s32 64, 64
      %2474 = vsyncadd [#allocation4], %s2473
      %s2476 = sshll.u32 [#allocation13], 4
      %s2477 = int_to_ptr.vmem [resolvable:$true] %s2476
      %2479 = dma.vmem_to_hbm [thread:$0]  %s2477, 64, %s27, [#allocation4]
    $region137: #{tpu_custom_call.1} parent=1 // pred_fallthru
      _
    // Predicated region
    $region138: #{tpu_custom_call.1} parent=1 // pred_check
      _
    $region139: #{tpu_custom_call.1} parent=1 // pred_check_branch
      %2481 = sbr.rel (0) target = $region141
    $region140: #{tpu_custom_call.1} parent=1 // pred_region
      %2482 = dma.done [#allocation4], 64
    $region141: #{tpu_custom_call.1} parent=1 // pred_fallthru
      _
    %2483 = vsyncpa [#allocation3], 1
    %2484 = vsyncpa [#allocation8], 1
    %2485 = vsyncpa [#allocation11], 1
    %2486 = vsyncpa [#allocation4], 1
    %2487 = vsyncpa [#allocation5], 1

</llo_original>
